<compile_context>
chip_gen: v6e
topology: v6e:2x2x1
jax: 0.10.0
libtpu: 0.0.40
codegen_flags: <defaults>
</compile_context>

<pallas_src>
import jax
import jax.numpy as jnp
from jax.experimental import pallas as pl
from jax.experimental.pallas import tpu as pltpu

# ----------------------------- model hyper-params -----------------------------
VOCAB = 64          # input_size
EMBED = 32          # embed_size
HIDDEN = 32         # hidden_size
CLASSES = 40        # class_count
LAYERS = 2          # LSTM_count
BATCH = 2
SEQ = 8

# AdaptiveLogSoftmaxWithLoss cutoffs: [round(C/20), 4*round(C/20)]
CUT1 = round(CLASSES / 20)          # 2
CUT2 = 4 * CUT1                     # 8
SHORTLIST = CUT1                    # head shortlist size
N_CLUSTERS = 2
HEAD_OUT = SHORTLIST + N_CLUSTERS   # 4
C0_SIZE = CUT2 - CUT1               # 6
C1_SIZE = CLASSES - CUT2            # 32
P0_DIM = HIDDEN // 4                # div_value=4.0 -> hidden // 4^(i+1)
P1_DIM = HIDDEN // 16

TB = SEQ * BATCH                    # 16 time-major rows (row = t*B + b)
H2 = 2 * HIDDEN                     # 64  combined [layer0 | layer1] state lanes
GG = 8 * HIDDEN                     # 256 combined gate lanes (4 gates x 2 layers)
SM_LANES = 128                      # padded adaptive-softmax projection lanes
SM_COLS = CLASSES + N_CLUSTERS      # 42 live logit columns

# Combined gate-lane layout: position p holds PyTorch gate GATE_ORDER[p];
# layer 0 in lanes [p*64, p*64+32), layer 1 in lanes [p*64+32, (p+1)*64).
GATE_ORDER = (1, 0, 3, 2)           # f, i, o, g   (g last -> simple tanh lane mask)
POS_F, POS_I, POS_O, POS_G = 0, 1, 2, 3

# Packed weight slab row layout (lanes = GG = 256 everywhere)
_ROW_XW = 0                         # [  0,  64): one-hot -> per-step gate addends
_ROW_REC = VOCAB                    # [ 64, 128): combined recurrent matrix
_ROW_SM = VOCAB + H2                # [128, 192): adaptive-softmax projection
PACK_ROWS = VOCAB + 2 * H2          # 192


# ------------------------------- fused kernel ---------------------------------
def _fused_forward_kernel(tok_ref, w_ref, h0_ref, c0_ref,
                          out_ref, hn_ref, cn_ref, gx_ref):
    """Whole eval forward in one kernel invocation (no grid).

    tok_ref: (T*B, 1) int32 token ids, time-major rows (t*B + b)
    w_ref:   (192, 256) packed weights (see prepare_params)
    h0/c0:   (LAYERS, B, H) initial state
    out:     (T*B, CLASSES) log-probs, time-major rows
    hn/cn:   (LAYERS, B, H) final state
    gx_ref:  (T*B, 256) VMEM scratch: per-step gate addends
    """
    f32 = jnp.float32

    # ---- fused embedding gather + layer-0 input projection (+ both biases) ----
    # w_x0 rows: layer-0 gate lanes = Emb @ W_ih0^T + b0, layer-1 gate lanes = b1
    # (one-hot rows sum to 1, so the b1 block broadcasts correctly per row).
    w_x0 = w_ref[_ROW_XW:_ROW_XW + VOCAB, :]                         # (64, 256)
    tok = tok_ref[...]                                               # (16, 1)
    vocab_iota = jax.lax.broadcasted_iota(jnp.int32, (TB, VOCAB), 1)
    onehot = jnp.where(vocab_iota == tok, 1.0, 0.0).astype(f32)      # (16, 64)
    gx_ref[...] = jnp.dot(onehot, w_x0, preferred_element_type=f32)  # (16, 256)

    # ---- hoisted lane masks / activation constants ----------------------------
    glane = jax.lax.broadcasted_iota(jnp.int32, (BATCH, GG), 1)
    is_g = glane >= POS_G * H2                   # g-gate lanes (both layers) -> tanh
    act_scale = jnp.where(is_g, 1.0, 0.5).astype(f32)   # sigmoid(x)=0.5*tanh(0.5x)+0.5
    act_bias = jnp.where(is_g, 0.0, 0.5).astype(f32)
    slane = jax.lax.broadcasted_iota(jnp.int32, (BATCH, H2), 1)
    is_l0 = slane < HIDDEN                       # layer-0 lanes of the combined state

    # ---- initial combined state: layer0 in lanes [0:H), layer1 in [H:2H) ------
    h = jnp.concatenate([h0_ref[0], h0_ref[1]], axis=1)              # (B, 64)
    c = jnp.concatenate([c0_ref[0], c0_ref[1]], axis=1)              # (B, 64)

    w_rec = w_ref[_ROW_REC:_ROW_REC + H2, :]                         # (64, 256)

    # ---- wavefront recurrence: step s = layer0 @ t=s and layer1 @ t=s-1 -------
    ys = []
    for s in range(SEQ + 1):                     # fully unrolled, 9 steps
        r = min(s, SEQ - 1) * BATCH              # layer-1 addend lanes (=b1) identical
        gates = (jnp.dot(h, w_rec, preferred_element_type=f32)
                 + gx_ref[r:r + BATCH, :])                           # (B, 256)
        t_all = jnp.tanh(gates * act_scale)      # single EUP push over all gates
        act = t_all * act_scale + act_bias       # [f0 f1 | i0 i1 | o0 o1 | g0 g1]
        f_g = act[:, POS_F * H2:(POS_F + 1) * H2]
        i_g = act[:, POS_I * H2:(POS_I + 1) * H2]
        o_g = act[:, POS_O * H2:(POS_O + 1) * H2]
        g_g = act[:, POS_G * H2:(POS_G + 1) * H2]
        c_new = f_g * c + i_g * g_g
        h_new = o_g * jnp.tanh(c_new)
        if s == 0:                               # layer-1 half not valid yet
            c = jnp.where(is_l0, c_new, c)
            h = jnp.where(is_l0, h_new, h)
        elif s == SEQ:                           # layer-0 already finished
            c = jnp.where(is_l0, c, c_new)
            h = jnp.where(is_l0, h, h_new)
        else:
            c, h = c_new, h_new
        if s >= 1:
            ys.append(h)                         # lanes [H:2H) hold y1(t = s-1)

    hn_ref[0] = h[:, 0:HIDDEN]
    hn_ref[1] = h[:, HIDDEN:H2]
    cn_ref[0] = c[:, 0:HIDDEN]
    cn_ref[1] = c[:, HIDDEN:H2]

    # ---- adaptive log-softmax over all classes (time-major rows) --------------
    # w_sm rows [0:H) are zero, so only the layer-1 half of the combined state
    # contributes; its columns are pre-ordered as
    # [shortlist(2) | cluster0(6) | cluster1(32) | head-cluster-logits(2) | 0-pad].
    flat = jnp.concatenate(ys, axis=0)                               # (16, 64)
    w_sm = w_ref[_ROW_SM:_ROW_SM + H2, 0:SM_LANES]                   # (64, 128)
    logits = jnp.dot(flat, w_sm, preferred_element_type=f32)         # (16, 128)

    lane = jax.lax.broadcasted_iota(jnp.int32, (TB, SM_LANES), 1)
    m_c0 = (lane >= SHORTLIST) & (lane < CUT2)                       # cluster-0 classes
    m_c1 = (lane >= CUT2) & (lane < CLASSES)                         # cluster-1 classes
    m_h = (lane < SHORTLIST) | ((lane >= CLASSES) & (lane < SM_COLS))  # head segment

    neg = jnp.float32(-1e30)
    max_h = jnp.max(jnp.where(m_h, logits, neg), axis=-1, keepdims=True)
    max_0 = jnp.max(jnp.where(m_c0, logits, neg), axis=-1, keepdims=True)
    max_1 = jnp.max(jnp.where(m_c1, logits, neg), axis=-1, keepdims=True)
    max_sel = jnp.where(m_c0, max_0, jnp.where(m_c1, max_1, max_h))
    e = jnp.exp(logits - max_sel)                # one exp over all live lanes
    sum_h = jnp.sum(jnp.where(m_h, e, 0.0), axis=-1, keepdims=True)
    sum_0 = jnp.sum(jnp.where(m_c0, e, 0.0), axis=-1, keepdims=True)
    sum_1 = jnp.sum(jnp.where(m_c1, e, 0.0), axis=-1, keepdims=True)
    sum_sel = jnp.where(m_c0, sum_0, jnp.where(m_c1, sum_1, sum_h))
    lp = logits - max_sel - jnp.log(sum_sel)     # per-segment log-softmax, all lanes
    # chain rule: cluster classes get the head's cluster log-prob (lanes 40 / 41)
    tail = jnp.where(m_c0, lp[:, CLASSES:CLASSES + 1],
                     jnp.where(m_c1, lp[:, CLASSES + 1:CLASSES + 2], 0.0))
    out_ref[...] = (lp + tail)[:, 0:CLASSES]     # single 40-lane store


def _fused_forward_call(tok_tm, packed_w, h0, c0):
    vmem = lambda: pl.BlockSpec(memory_space=pltpu.MemorySpace.VMEM)
    return pl.pallas_call(
        _fused_forward_kernel,
        out_shape=(
            jax.ShapeDtypeStruct((TB, CLASSES), jnp.float32),
            jax.ShapeDtypeStruct((LAYERS, BATCH, HIDDEN), jnp.float32),
            jax.ShapeDtypeStruct((LAYERS, BATCH, HIDDEN), jnp.float32),
        ),
        in_specs=[vmem(), vmem(), vmem(), vmem()],
        out_specs=(vmem(), vmem(), vmem()),
        scratch_shapes=[pltpu.VMEM((TB, GG), jnp.float32)],
    )(tok_tm, packed_w, h0, c0)


# --------------------------- one-time parameter prep ---------------------------
def prepare_params(params):
    """Fold/transposes/packs all weights once, off the per-call hot path."""
    l0, l1 = params["lstm"]
    emb = params["embedding"].astype(jnp.float32)                     # (V, E)
    b0 = (l0["b_ih"] + l0["b_hh"]).astype(jnp.float32)                # (4H,)
    b1 = (l1["b_ih"] + l1["b_hh"]).astype(jnp.float32)                # (4H,)
    emb_g = emb @ l0["w_ih"].T.astype(jnp.float32) + b0[None, :]      # (V, 4H)
    whh0_t = l0["w_hh"].T.astype(jnp.float32)                         # (H, 4H)
    wih1_t = l1["w_ih"].T.astype(jnp.float32)                         # (H, 4H)
    whh1_t = l1["w_hh"].T.astype(jnp.float32)                         # (H, 4H)

    zeros_hh = jnp.zeros((HIDDEN, HIDDEN), jnp.float32)
    x_cols, top_cols, bot_cols = [], [], []
    for p in range(4):
        k = GATE_ORDER[p]
        sl = slice(k * HIDDEN, (k + 1) * HIDDEN)
        x_cols += [emb_g[:, sl],
                   jnp.broadcast_to(b1[None, sl], (VOCAB, HIDDEN))]
        top_cols += [whh0_t[:, sl], wih1_t[:, sl]]       # multiplies h0
        bot_cols += [zeros_hh, whh1_t[:, sl]]            # multiplies h1
    w_x0 = jnp.concatenate(x_cols, axis=1)                            # (V, 256)
    w_rec = jnp.concatenate(
        [jnp.concatenate(top_cols, axis=1),
         jnp.concatenate(bot_cols, axis=1)], axis=0)                  # (2H, 256)

    # Adaptive-softmax projection: tail linears folded ((O@P)^T is exact,
    # all bias-free), columns reordered so output lanes [0:40) are already in
    # class order and the two head cluster logits sit at lanes 40/41.
    head_t = params["head_w"].T.astype(jnp.float32)                   # (H, 4)
    w_c0 = (params["o0_w"] @ params["p0_w"]).T.astype(jnp.float32)    # (H, 6)
    w_c1 = (params["o1_w"] @ params["p1_w"]).T.astype(jnp.float32)    # (H, 32)
    w_sm = jnp.concatenate(
        [head_t[:, :SHORTLIST], w_c0, w_c1, head_t[:, SHORTLIST:]], axis=1)  # (H, 42)
    w_sm = jnp.concatenate(
        [jnp.zeros((HIDDEN, SM_COLS), jnp.float32), w_sm], axis=0)    # (2H, 42)
    w_sm = jnp.pad(w_sm, ((0, 0), (0, GG - SM_COLS)))                 # (2H, 256)

    packed = jnp.concatenate([w_x0, w_rec, w_sm], axis=0)             # (192, 256)
    assert packed.shape == (PACK_ROWS, GG)
    return {"packed": packed}


# ------------------------------- parameter init --------------------------------
def init_params(key):
    ks = jax.random.split(key, 16)
    k = 1.0 / jnp.sqrt(HIDDEN)
    p = {}
    p["embedding"] = jax.random.normal(ks[0], (VOCAB, EMBED), jnp.float32)
    lstm = []
    for l in range(LAYERS):
        e_in = EMBED if l == 0 else HIDDEN
        base = 1 + 4 * l
        lstm.append(dict(
            w_ih=jax.random.uniform(ks[base + 0], (4 * HIDDEN, e_in), jnp.float32, -k, k),
            w_hh=jax.random.uniform(ks[base + 1], (4 * HIDDEN, HIDDEN), jnp.float32, -k, k),
            b_ih=jax.random.uniform(ks[base + 2], (4 * HIDDEN,), jnp.float32, -k, k),
            b_hh=jax.random.uniform(ks[base + 3], (4 * HIDDEN,), jnp.float32, -k, k),
        ))
    p["lstm"] = lstm
    # AdaptiveLogSoftmaxWithLoss (all Linear layers bias=False)
    p["head_w"] = jax.random.uniform(ks[10], (HEAD_OUT, HIDDEN), jnp.float32, -k, k)
    p["p0_w"] = jax.random.uniform(ks[11], (P0_DIM, HIDDEN), jnp.float32, -k, k)
    p["o0_w"] = jax.random.uniform(ks[12], (C0_SIZE, P0_DIM), jnp.float32, -k, k)
    p["p1_w"] = jax.random.uniform(ks[13], (P1_DIM, HIDDEN), jnp.float32, -k, k)
    p["o1_w"] = jax.random.uniform(ks[14], (C1_SIZE, P1_DIM), jnp.float32, -k, k)
    return p


# --------------------------------- forward ------------------------------------
@jax.jit
def lstm_model_forward(prepared, x_tokens, prev_state):
    """Eval-mode forward: returns (log_probs (B*T, CLASSES), (h_n, c_n))."""
    h0, c0 = prev_state                                   # (LAYERS, B, H) each
    tok_tm = jnp.transpose(x_tokens).reshape(TB, 1).astype(jnp.int32)
    lp_tm, h_n, c_n = _fused_forward_call(
        tok_tm, prepared["packed"],
        h0.astype(jnp.float32), c0.astype(jnp.float32))
    # kernel rows are time-major (t*B+b); PyTorch batch_first flatten is (b*T+t)
    log_probs = (lp_tm.reshape(SEQ, BATCH, CLASSES)
                 .transpose(1, 0, 2).reshape(BATCH * SEQ, CLASSES))
    return log_probs, (h_n, c_n)

# TODO(synk): training branch (AdaptiveLogSoftmaxWithLoss loss with ignore_class
# filtering) is not implemented; only the eval-mode log_prob path is kernelized.


# ----------------------------- pure-JAX reference ------------------------------
def reference_forward(params, x_tokens, prev_state):
    h_all, c_all = prev_state
    x = params["embedding"][x_tokens]                     # (B, T, E)
    h_n, c_n = [], []
    for l in range(LAYERS):
        lp_ = params["lstm"][l]
        b = lp_["b_ih"] + lp_["b_hh"]
        h, c = h_all[l], c_all[l]
        outs = []
        for t in range(SEQ):
            gates = x[:, t, :] @ lp_["w_ih"].T + h @ lp_["w_hh"].T + b
            i = jax.nn.sigmoid(gates[:, :HIDDEN])
            f = jax.nn.sigmoid(gates[:, HIDDEN:2 * HIDDEN])
            g = jnp.tanh(gates[:, 2 * HIDDEN:3 * HIDDEN])
            o = jax.nn.sigmoid(gates[:, 3 * HIDDEN:])
            c = f * c + i * g
            h = o * jnp.tanh(c)
            outs.append(h)
        x = jnp.stack(outs, axis=1)                       # (B, T, H)
        h_n.append(h)
        c_n.append(c)
    flat = x.reshape(-1, HIDDEN)
    head_lp = jax.nn.log_softmax(flat @ params["head_w"].T, axis=-1)
    c0 = flat @ params["p0_w"].T @ params["o0_w"].T
    c1 = flat @ params["p1_w"].T @ params["o1_w"].T
    c0_lp = jax.nn.log_softmax(c0, axis=-1) + head_lp[:, SHORTLIST:SHORTLIST + 1]
    c1_lp = jax.nn.log_softmax(c1, axis=-1) + head_lp[:, SHORTLIST + 1:SHORTLIST + 2]
    lp = jnp.concatenate([head_lp[:, :SHORTLIST], c0_lp, c1_lp], axis=1)
    return lp, (jnp.stack(h_n), jnp.stack(c_n))


# ----------------------------------- main --------------------------------------
if __name__ == "__main__":
    key = jax.random.PRNGKey(0)
    pkey, xkey, skey = jax.random.split(key, 3)
    params = init_params(pkey)
    prepared = prepare_params(params)         # one-time weight fold/pack

    x_tokens = jax.random.randint(xkey, (BATCH, SEQ), 0, VOCAB, dtype=jnp.int32)

    # ---- case 1: fresh (zero) state -------------------------------------------
    state0 = (jnp.zeros((LAYERS, BATCH, HIDDEN), jnp.float32),
              jnp.zeros((LAYERS, BATCH, HIDDEN), jnp.float32))
    log_probs, (h_n, c_n) = lstm_model_forward(prepared, x_tokens, state0)
    jax.block_until_ready((log_probs, h_n, c_n))

    assert log_probs.shape == (BATCH * SEQ, CLASSES)
    assert h_n.shape == (LAYERS, BATCH, HIDDEN) and c_n.shape == (LAYERS, BATCH, HIDDEN)

    # Rows of a log-probability distribution must exponentiate-sum to 1.
    row_sums = jnp.exp(log_probs).sum(axis=1)
    assert bool(jnp.all(jnp.abs(row_sums - 1.0) < 1e-4)), row_sums

    ref_lp, (ref_h, ref_c) = reference_forward(params, x_tokens, state0)
    assert bool(jnp.allclose(log_probs, ref_lp, rtol=1e-4, atol=1e-4))
    assert bool(jnp.allclose(h_n, ref_h, rtol=1e-4, atol=1e-4))
    assert bool(jnp.allclose(c_n, ref_c, rtol=1e-4, atol=1e-4))

    # ---- case 2: carried (non-zero) state — exercises the state path ----------
    k1, k2 = jax.random.split(skey)
    state1 = (0.5 * jax.random.normal(k1, (LAYERS, BATCH, HIDDEN), jnp.float32),
              0.5 * jax.random.normal(k2, (LAYERS, BATCH, HIDDEN), jnp.float32))
    log_probs2, (h_n2, c_n2) = lstm_model_forward(prepared, x_tokens, state1)
    jax.block_until_ready((log_probs2, h_n2, c_n2))
    ref_lp2, (ref_h2, ref_c2) = reference_forward(params, x_tokens, state1)
    assert bool(jnp.allclose(log_probs2, ref_lp2, rtol=1e-4, atol=1e-4))
    assert bool(jnp.allclose(h_n2, ref_h2, rtol=1e-4, atol=1e-4))
    assert bool(jnp.allclose(c_n2, ref_c2, rtol=1e-4, atol=1e-4))

    print("KERNEL_OK")
</pallas_src>

<mosaic_0001>
module attributes {stable_mosaic.version = 11 : i64} {
  func.func @_fused_forward_kernel(%arg0: memref<16x1xi32, #tpu.memory_space<vmem>>, %arg1: memref<192x256xf32, #tpu.memory_space<vmem>>, %arg2: memref<2x2x32xf32, #tpu.memory_space<vmem>>, %arg3: memref<2x2x32xf32, #tpu.memory_space<vmem>>, %arg4: memref<16x40xf32, #tpu.memory_space<vmem>>, %arg5: memref<2x2x32xf32, #tpu.memory_space<vmem>>, %arg6: memref<2x2x32xf32, #tpu.memory_space<vmem>>, %arg7: memref<16x256xf32, #tpu.memory_space<vmem>>) attributes {dimension_semantics = [], scalar_prefetch = 0 : i64, scratch_operands = 1 : i64, tpu.core_type = #tpu.core_type<tc>} {
    %c0 = arith.constant 0 : index
    %c0_0 = arith.constant 0 : index
    %0 = vector.load %arg1[%c0, %c0_0] : memref<192x256xf32, #tpu.memory_space<vmem>>, vector<64x256xf32>
    %c0_1 = arith.constant 0 : index
    %c0_2 = arith.constant 0 : index
    %1 = vector.load %arg0[%c0_1, %c0_2] : memref<16x1xi32, #tpu.memory_space<vmem>>, vector<16x1xi32>
    %2 = tpu.iota {dimensions = array<i32: 1>} : vector<16x64xi32>
    %3 = vector.broadcast %1 : vector<16x1xi32> to vector<16x64xi32>
    %4 = arith.cmpi eq, %2, %3 : vector<16x64xi32>
    %cst = arith.constant 1.000000e+00 : f32
    %cst_3 = arith.constant 0.000000e+00 : f32
    %5 = vector.broadcast %cst : f32 to vector<16x64xf32>
    %6 = vector.broadcast %cst_3 : f32 to vector<16x64xf32>
    %7 = arith.select %4, %5, %6 : vector<16x64xi1>, vector<16x64xf32>
    %cst_4 = arith.constant dense<0.000000e+00> : vector<16x256xf32>
    %8 = tpu.matmul %7, %0, %cst_4 {dimension_numbers = #tpu.dot_dimension_numbers<[1], [0], [0], [1], [0, 0, 1, 1], [], []>} : vector<16x64xf32>, vector<64x256xf32>, vector<16x256xf32> -> vector<16x256xf32>
    %c0_5 = arith.constant 0 : index
    %c0_6 = arith.constant 0 : index
    %9 = vector.load %arg7[%c0_5, %c0_6] : memref<16x256xf32, #tpu.memory_space<vmem>>, vector<16x256xf32>
    tpu.vector_store %arg7[%c0_5, %c0_6], %8 {strides = array<i32>} : memref<16x256xf32, #tpu.memory_space<vmem>>, vector<16x256xf32>,
    %10 = tpu.iota {dimensions = array<i32: 1>} : vector<2x256xi32>
    %c192_i32 = arith.constant 192 : i32
    %11 = vector.broadcast %c192_i32 : i32 to vector<2x256xi32>
    %12 = arith.cmpi sge, %10, %11 : vector<2x256xi32>
    %cst_7 = arith.constant 1.000000e+00 : f32
    %cst_8 = arith.constant 5.000000e-01 : f32
    %13 = vector.broadcast %cst_7 : f32 to vector<2x256xf32>
    %14 = vector.broadcast %cst_8 : f32 to vector<2x256xf32>
    %15 = arith.select %12, %13, %14 : vector<2x256xi1>, vector<2x256xf32>
    %cst_9 = arith.constant 0.000000e+00 : f32
    %cst_10 = arith.constant 5.000000e-01 : f32
    %16 = vector.broadcast %cst_9 : f32 to vector<2x256xf32>
    %17 = vector.broadcast %cst_10 : f32 to vector<2x256xf32>
    %18 = arith.select %12, %16, %17 : vector<2x256xi1>, vector<2x256xf32>
    %19 = tpu.iota {dimensions = array<i32: 1>} : vector<2x64xi32>
    %c32_i32 = arith.constant 32 : i32
    %20 = vector.broadcast %c32_i32 : i32 to vector<2x64xi32>
    %21 = arith.cmpi slt, %19, %20 : vector<2x64xi32>
    %c0_11 = arith.constant 0 : index
    %c0_12 = arith.constant 0 : index
    %c0_13 = arith.constant 0 : index
    %22 = vector.load %arg2[%c0_11, %c0_12, %c0_13] : memref<2x2x32xf32, #tpu.memory_space<vmem>>, vector<1x2x32xf32>
    %23 = vector.shape_cast %22 : vector<1x2x32xf32> to vector<2x32xf32>
    %c1 = arith.constant 1 : index
    %c0_14 = arith.constant 0 : index
    %c0_15 = arith.constant 0 : index
    %24 = vector.load %arg2[%c1, %c0_14, %c0_15] : memref<2x2x32xf32, #tpu.memory_space<vmem>>, vector<1x2x32xf32>
    %25 = vector.shape_cast %24 : vector<1x2x32xf32> to vector<2x32xf32>
    %26 = tpu.concatenate %23, %25 in 1 : vector<2x32xf32>, vector<2x32xf32> -> vector<2x64xf32>
    %c0_16 = arith.constant 0 : index
    %c0_17 = arith.constant 0 : index
    %c0_18 = arith.constant 0 : index
    %27 = vector.load %arg3[%c0_16, %c0_17, %c0_18] : memref<2x2x32xf32, #tpu.memory_space<vmem>>, vector<1x2x32xf32>
    %28 = vector.shape_cast %27 : vector<1x2x32xf32> to vector<2x32xf32>
    %c1_19 = arith.constant 1 : index
    %c0_20 = arith.constant 0 : index
    %c0_21 = arith.constant 0 : index
    %29 = vector.load %arg3[%c1_19, %c0_20, %c0_21] : memref<2x2x32xf32, #tpu.memory_space<vmem>>, vector<1x2x32xf32>
    %30 = vector.shape_cast %29 : vector<1x2x32xf32> to vector<2x32xf32>
    %31 = tpu.concatenate %28, %30 in 1 : vector<2x32xf32>, vector<2x32xf32> -> vector<2x64xf32>
    %c64 = arith.constant 64 : index
    %c0_22 = arith.constant 0 : index
    %32 = vector.load %arg1[%c64, %c0_22] : memref<192x256xf32, #tpu.memory_space<vmem>>, vector<64x256xf32>
    %cst_23 = arith.constant dense<0.000000e+00> : vector<2x256xf32>
    %33 = tpu.matmul %26, %32, %cst_23 {dimension_numbers = #tpu.dot_dimension_numbers<[1], [0], [0], [1], [0, 0, 1, 1], [], []>} : vector<2x64xf32>, vector<64x256xf32>, vector<2x256xf32> -> vector<2x256xf32>
    %c0_24 = arith.constant 0 : index
    %c0_25 = arith.constant 0 : index
    %34 = vector.load %arg7[%c0_24, %c0_25] : memref<16x256xf32, #tpu.memory_space<vmem>>, vector<2x256xf32>
    %35 = arith.addf %33, %34 : vector<2x256xf32>
    %36 = arith.mulf %35, %15 : vector<2x256xf32>
    %37 = math.tanh %36 : vector<2x256xf32>
    %38 = arith.mulf %37, %15 : vector<2x256xf32>
    %39 = arith.addf %38, %18 : vector<2x256xf32>
    %40 = vector.extract_strided_slice %39 {offsets = [0, 0], sizes = [2, 64], strides = [1, 1]} : vector<2x256xf32> to vector<2x64xf32>
    %41 = vector.extract_strided_slice %39 {offsets = [0, 64], sizes = [2, 64], strides = [1, 1]} : vector<2x256xf32> to vector<2x64xf32>
    %42 = vector.extract_strided_slice %39 {offsets = [0, 128], sizes = [2, 64], strides = [1, 1]} : vector<2x256xf32> to vector<2x64xf32>
    %43 = vector.extract_strided_slice %39 {offsets = [0, 192], sizes = [2, 64], strides = [1, 1]} : vector<2x256xf32> to vector<2x64xf32>
    %44 = arith.mulf %40, %31 : vector<2x64xf32>
    %45 = arith.mulf %41, %43 : vector<2x64xf32>
    %46 = arith.addf %44, %45 : vector<2x64xf32>
    %47 = math.tanh %46 : vector<2x64xf32>
    %48 = arith.mulf %42, %47 : vector<2x64xf32>
    %49 = arith.select %21, %46, %31 : vector<2x64xi1>, vector<2x64xf32>
    %50 = arith.select %21, %48, %26 : vector<2x64xi1>, vector<2x64xf32>
    %cst_26 = arith.constant dense<0.000000e+00> : vector<2x256xf32>
    %51 = tpu.matmul %50, %32, %cst_26 {dimension_numbers = #tpu.dot_dimension_numbers<[1], [0], [0], [1], [0, 0, 1, 1], [], []>} : vector<2x64xf32>, vector<64x256xf32>, vector<2x256xf32> -> vector<2x256xf32>
    %c2 = arith.constant 2 : index
    %c0_27 = arith.constant 0 : index
    %52 = vector.load %arg7[%c2, %c0_27] : memref<16x256xf32, #tpu.memory_space<vmem>>, vector<2x256xf32>
    %53 = arith.addf %51, %52 : vector<2x256xf32>
    %54 = arith.mulf %53, %15 : vector<2x256xf32>
    %55 = math.tanh %54 : vector<2x256xf32>
    %56 = arith.mulf %55, %15 : vector<2x256xf32>
    %57 = arith.addf %56, %18 : vector<2x256xf32>
    %58 = vector.extract_strided_slice %57 {offsets = [0, 0], sizes = [2, 64], strides = [1, 1]} : vector<2x256xf32> to vector<2x64xf32>
    %59 = vector.extract_strided_slice %57 {offsets = [0, 64], sizes = [2, 64], strides = [1, 1]} : vector<2x256xf32> to vector<2x64xf32>
    %60 = vector.extract_strided_slice %57 {offsets = [0, 128], sizes = [2, 64], strides = [1, 1]} : vector<2x256xf32> to vector<2x64xf32>
    %61 = vector.extract_strided_slice %57 {offsets = [0, 192], sizes = [2, 64], strides = [1, 1]} : vector<2x256xf32> to vector<2x64xf32>
    %62 = arith.mulf %58, %49 : vector<2x64xf32>
    %63 = arith.mulf %59, %61 : vector<2x64xf32>
    %64 = arith.addf %62, %63 : vector<2x64xf32>
    %65 = math.tanh %64 : vector<2x64xf32>
    %66 = arith.mulf %60, %65 : vector<2x64xf32>
    %cst_28 = arith.constant dense<0.000000e+00> : vector<2x256xf32>
    %67 = tpu.matmul %66, %32, %cst_28 {dimension_numbers = #tpu.dot_dimension_numbers<[1], [0], [0], [1], [0, 0, 1, 1], [], []>} : vector<2x64xf32>, vector<64x256xf32>, vector<2x256xf32> -> vector<2x256xf32>
    %c4 = arith.constant 4 : index
    %c0_29 = arith.constant 0 : index
    %68 = vector.load %arg7[%c4, %c0_29] : memref<16x256xf32, #tpu.memory_space<vmem>>, vector<2x256xf32>
    %69 = arith.addf %67, %68 : vector<2x256xf32>
    %70 = arith.mulf %69, %15 : vector<2x256xf32>
    %71 = math.tanh %70 : vector<2x256xf32>
    %72 = arith.mulf %71, %15 : vector<2x256xf32>
    %73 = arith.addf %72, %18 : vector<2x256xf32>
    %74 = vector.extract_strided_slice %73 {offsets = [0, 0], sizes = [2, 64], strides = [1, 1]} : vector<2x256xf32> to vector<2x64xf32>
    %75 = vector.extract_strided_slice %73 {offsets = [0, 64], sizes = [2, 64], strides = [1, 1]} : vector<2x256xf32> to vector<2x64xf32>
    %76 = vector.extract_strided_slice %73 {offsets = [0, 128], sizes = [2, 64], strides = [1, 1]} : vector<2x256xf32> to vector<2x64xf32>
    %77 = vector.extract_strided_slice %73 {offsets = [0, 192], sizes = [2, 64], strides = [1, 1]} : vector<2x256xf32> to vector<2x64xf32>
    %78 = arith.mulf %74, %64 : vector<2x64xf32>
    %79 = arith.mulf %75, %77 : vector<2x64xf32>
    %80 = arith.addf %78, %79 : vector<2x64xf32>
    %81 = math.tanh %80 : vector<2x64xf32>
    %82 = arith.mulf %76, %81 : vector<2x64xf32>
    %cst_30 = arith.constant dense<0.000000e+00> : vector<2x256xf32>
    %83 = tpu.matmul %82, %32, %cst_30 {dimension_numbers = #tpu.dot_dimension_numbers<[1], [0], [0], [1], [0, 0, 1, 1], [], []>} : vector<2x64xf32>, vector<64x256xf32>, vector<2x256xf32> -> vector<2x256xf32>
    %c6 = arith.constant 6 : index
    %c0_31 = arith.constant 0 : index
    %84 = vector.load %arg7[%c6, %c0_31] : memref<16x256xf32, #tpu.memory_space<vmem>>, vector<2x256xf32>
    %85 = arith.addf %83, %84 : vector<2x256xf32>
    %86 = arith.mulf %85, %15 : vector<2x256xf32>
    %87 = math.tanh %86 : vector<2x256xf32>
    %88 = arith.mulf %87, %15 : vector<2x256xf32>
    %89 = arith.addf %88, %18 : vector<2x256xf32>
    %90 = vector.extract_strided_slice %89 {offsets = [0, 0], sizes = [2, 64], strides = [1, 1]} : vector<2x256xf32> to vector<2x64xf32>
    %91 = vector.extract_strided_slice %89 {offsets = [0, 64], sizes = [2, 64], strides = [1, 1]} : vector<2x256xf32> to vector<2x64xf32>
    %92 = vector.extract_strided_slice %89 {offsets = [0, 128], sizes = [2, 64], strides = [1, 1]} : vector<2x256xf32> to vector<2x64xf32>
    %93 = vector.extract_strided_slice %89 {offsets = [0, 192], sizes = [2, 64], strides = [1, 1]} : vector<2x256xf32> to vector<2x64xf32>
    %94 = arith.mulf %90, %80 : vector<2x64xf32>
    %95 = arith.mulf %91, %93 : vector<2x64xf32>
    %96 = arith.addf %94, %95 : vector<2x64xf32>
    %97 = math.tanh %96 : vector<2x64xf32>
    %98 = arith.mulf %92, %97 : vector<2x64xf32>
    %cst_32 = arith.constant dense<0.000000e+00> : vector<2x256xf32>
    %99 = tpu.matmul %98, %32, %cst_32 {dimension_numbers = #tpu.dot_dimension_numbers<[1], [0], [0], [1], [0, 0, 1, 1], [], []>} : vector<2x64xf32>, vector<64x256xf32>, vector<2x256xf32> -> vector<2x256xf32>
    %c8 = arith.constant 8 : index
    %c0_33 = arith.constant 0 : index
    %100 = vector.load %arg7[%c8, %c0_33] : memref<16x256xf32, #tpu.memory_space<vmem>>, vector<2x256xf32>
    %101 = arith.addf %99, %100 : vector<2x256xf32>
    %102 = arith.mulf %101, %15 : vector<2x256xf32>
    %103 = math.tanh %102 : vector<2x256xf32>
    %104 = arith.mulf %103, %15 : vector<2x256xf32>
    %105 = arith.addf %104, %18 : vector<2x256xf32>
    %106 = vector.extract_strided_slice %105 {offsets = [0, 0], sizes = [2, 64], strides = [1, 1]} : vector<2x256xf32> to vector<2x64xf32>
    %107 = vector.extract_strided_slice %105 {offsets = [0, 64], sizes = [2, 64], strides = [1, 1]} : vector<2x256xf32> to vector<2x64xf32>
    %108 = vector.extract_strided_slice %105 {offsets = [0, 128], sizes = [2, 64], strides = [1, 1]} : vector<2x256xf32> to vector<2x64xf32>
    %109 = vector.extract_strided_slice %105 {offsets = [0, 192], sizes = [2, 64], strides = [1, 1]} : vector<2x256xf32> to vector<2x64xf32>
    %110 = arith.mulf %106, %96 : vector<2x64xf32>
    %111 = arith.mulf %107, %109 : vector<2x64xf32>
    %112 = arith.addf %110, %111 : vector<2x64xf32>
    %113 = math.tanh %112 : vector<2x64xf32>
    %114 = arith.mulf %108, %113 : vector<2x64xf32>
    %cst_34 = arith.constant dense<0.000000e+00> : vector<2x256xf32>
    %115 = tpu.matmul %114, %32, %cst_34 {dimension_numbers = #tpu.dot_dimension_numbers<[1], [0], [0], [1], [0, 0, 1, 1], [], []>} : vector<2x64xf32>, vector<64x256xf32>, vector<2x256xf32> -> vector<2x256xf32>
    %c10 = arith.constant 10 : index
    %c0_35 = arith.constant 0 : index
    %116 = vector.load %arg7[%c10, %c0_35] : memref<16x256xf32, #tpu.memory_space<vmem>>, vector<2x256xf32>
    %117 = arith.addf %115, %116 : vector<2x256xf32>
    %118 = arith.mulf %117, %15 : vector<2x256xf32>
    %119 = math.tanh %118 : vector<2x256xf32>
    %120 = arith.mulf %119, %15 : vector<2x256xf32>
    %121 = arith.addf %120, %18 : vector<2x256xf32>
    %122 = vector.extract_strided_slice %121 {offsets = [0, 0], sizes = [2, 64], strides = [1, 1]} : vector<2x256xf32> to vector<2x64xf32>
    %123 = vector.extract_strided_slice %121 {offsets = [0, 64], sizes = [2, 64], strides = [1, 1]} : vector<2x256xf32> to vector<2x64xf32>
    %124 = vector.extract_strided_slice %121 {offsets = [0, 128], sizes = [2, 64], strides = [1, 1]} : vector<2x256xf32> to vector<2x64xf32>
    %125 = vector.extract_strided_slice %121 {offsets = [0, 192], sizes = [2, 64], strides = [1, 1]} : vector<2x256xf32> to vector<2x64xf32>
    %126 = arith.mulf %122, %112 : vector<2x64xf32>
    %127 = arith.mulf %123, %125 : vector<2x64xf32>
    %128 = arith.addf %126, %127 : vector<2x64xf32>
    %129 = math.tanh %128 : vector<2x64xf32>
    %130 = arith.mulf %124, %129 : vector<2x64xf32>
    %cst_36 = arith.constant dense<0.000000e+00> : vector<2x256xf32>
    %131 = tpu.matmul %130, %32, %cst_36 {dimension_numbers = #tpu.dot_dimension_numbers<[1], [0], [0], [1], [0, 0, 1, 1], [], []>} : vector<2x64xf32>, vector<64x256xf32>, vector<2x256xf32> -> vector<2x256xf32>
    %c12 = arith.constant 12 : index
    %c0_37 = arith.constant 0 : index
    %132 = vector.load %arg7[%c12, %c0_37] : memref<16x256xf32, #tpu.memory_space<vmem>>, vector<2x256xf32>
    %133 = arith.addf %131, %132 : vector<2x256xf32>
    %134 = arith.mulf %133, %15 : vector<2x256xf32>
    %135 = math.tanh %134 : vector<2x256xf32>
    %136 = arith.mulf %135, %15 : vector<2x256xf32>
    %137 = arith.addf %136, %18 : vector<2x256xf32>
    %138 = vector.extract_strided_slice %137 {offsets = [0, 0], sizes = [2, 64], strides = [1, 1]} : vector<2x256xf32> to vector<2x64xf32>
    %139 = vector.extract_strided_slice %137 {offsets = [0, 64], sizes = [2, 64], strides = [1, 1]} : vector<2x256xf32> to vector<2x64xf32>
    %140 = vector.extract_strided_slice %137 {offsets = [0, 128], sizes = [2, 64], strides = [1, 1]} : vector<2x256xf32> to vector<2x64xf32>
    %141 = vector.extract_strided_slice %137 {offsets = [0, 192], sizes = [2, 64], strides = [1, 1]} : vector<2x256xf32> to vector<2x64xf32>
    %142 = arith.mulf %138, %128 : vector<2x64xf32>
    %143 = arith.mulf %139, %141 : vector<2x64xf32>
    %144 = arith.addf %142, %143 : vector<2x64xf32>
    %145 = math.tanh %144 : vector<2x64xf32>
    %146 = arith.mulf %140, %145 : vector<2x64xf32>
    %cst_38 = arith.constant dense<0.000000e+00> : vector<2x256xf32>
    %147 = tpu.matmul %146, %32, %cst_38 {dimension_numbers = #tpu.dot_dimension_numbers<[1], [0], [0], [1], [0, 0, 1, 1], [], []>} : vector<2x64xf32>, vector<64x256xf32>, vector<2x256xf32> -> vector<2x256xf32>
    %c14 = arith.constant 14 : index
    %c0_39 = arith.constant 0 : index
    %148 = vector.load %arg7[%c14, %c0_39] : memref<16x256xf32, #tpu.memory_space<vmem>>, vector<2x256xf32>
    %149 = arith.addf %147, %148 : vector<2x256xf32>
    %150 = arith.mulf %149, %15 : vector<2x256xf32>
    %151 = math.tanh %150 : vector<2x256xf32>
    %152 = arith.mulf %151, %15 : vector<2x256xf32>
    %153 = arith.addf %152, %18 : vector<2x256xf32>
    %154 = vector.extract_strided_slice %153 {offsets = [0, 0], sizes = [2, 64], strides = [1, 1]} : vector<2x256xf32> to vector<2x64xf32>
    %155 = vector.extract_strided_slice %153 {offsets = [0, 64], sizes = [2, 64], strides = [1, 1]} : vector<2x256xf32> to vector<2x64xf32>
    %156 = vector.extract_strided_slice %153 {offsets = [0, 128], sizes = [2, 64], strides = [1, 1]} : vector<2x256xf32> to vector<2x64xf32>
    %157 = vector.extract_strided_slice %153 {offsets = [0, 192], sizes = [2, 64], strides = [1, 1]} : vector<2x256xf32> to vector<2x64xf32>
    %158 = arith.mulf %154, %144 : vector<2x64xf32>
    %159 = arith.mulf %155, %157 : vector<2x64xf32>
    %160 = arith.addf %158, %159 : vector<2x64xf32>
    %161 = math.tanh %160 : vector<2x64xf32>
    %162 = arith.mulf %156, %161 : vector<2x64xf32>
    %cst_40 = arith.constant dense<0.000000e+00> : vector<2x256xf32>
    %163 = tpu.matmul %162, %32, %cst_40 {dimension_numbers = #tpu.dot_dimension_numbers<[1], [0], [0], [1], [0, 0, 1, 1], [], []>} : vector<2x64xf32>, vector<64x256xf32>, vector<2x256xf32> -> vector<2x256xf32>
    %c14_41 = arith.constant 14 : index
    %c0_42 = arith.constant 0 : index
    %164 = vector.load %arg7[%c14_41, %c0_42] : memref<16x256xf32, #tpu.memory_space<vmem>>, vector<2x256xf32>
    %165 = arith.addf %163, %164 : vector<2x256xf32>
    %166 = arith.mulf %165, %15 : vector<2x256xf32>
    %167 = math.tanh %166 : vector<2x256xf32>
    %168 = arith.mulf %167, %15 : vector<2x256xf32>
    %169 = arith.addf %168, %18 : vector<2x256xf32>
    %170 = vector.extract_strided_slice %169 {offsets = [0, 0], sizes = [2, 64], strides = [1, 1]} : vector<2x256xf32> to vector<2x64xf32>
    %171 = vector.extract_strided_slice %169 {offsets = [0, 64], sizes = [2, 64], strides = [1, 1]} : vector<2x256xf32> to vector<2x64xf32>
    %172 = vector.extract_strided_slice %169 {offsets = [0, 128], sizes = [2, 64], strides = [1, 1]} : vector<2x256xf32> to vector<2x64xf32>
    %173 = vector.extract_strided_slice %169 {offsets = [0, 192], sizes = [2, 64], strides = [1, 1]} : vector<2x256xf32> to vector<2x64xf32>
    %174 = arith.mulf %170, %160 : vector<2x64xf32>
    %175 = arith.mulf %171, %173 : vector<2x64xf32>
    %176 = arith.addf %174, %175 : vector<2x64xf32>
    %177 = math.tanh %176 : vector<2x64xf32>
    %178 = arith.mulf %172, %177 : vector<2x64xf32>
    %179 = arith.select %21, %160, %176 : vector<2x64xi1>, vector<2x64xf32>
    %180 = arith.select %21, %162, %178 : vector<2x64xi1>, vector<2x64xf32>
    %181 = vector.extract_strided_slice %180 {offsets = [0, 0], sizes = [2, 32], strides = [1, 1]} : vector<2x64xf32> to vector<2x32xf32>
    %c0_43 = arith.constant 0 : index
    %c0_44 = arith.constant 0 : index
    %c0_45 = arith.constant 0 : index
    %182 = vector.load %arg5[%c0_43, %c0_44, %c0_45] : memref<2x2x32xf32, #tpu.memory_space<vmem>>, vector<1x2x32xf32>
    %183 = vector.shape_cast %182 : vector<1x2x32xf32> to vector<2x32xf32>
    %184 = vector.shape_cast %181 : vector<2x32xf32> to vector<1x2x32xf32>
    tpu.vector_store %arg5[%c0_43, %c0_44, %c0_45], %184 {strides = array<i32>} : memref<2x2x32xf32, #tpu.memory_space<vmem>>, vector<1x2x32xf32>,
    %185 = vector.extract_strided_slice %180 {offsets = [0, 32], sizes = [2, 32], strides = [1, 1]} : vector<2x64xf32> to vector<2x32xf32>
    %c1_46 = arith.constant 1 : index
    %c0_47 = arith.constant 0 : index
    %c0_48 = arith.constant 0 : index
    %186 = vector.load %arg5[%c1_46, %c0_47, %c0_48] : memref<2x2x32xf32, #tpu.memory_space<vmem>>, vector<1x2x32xf32>
    %187 = vector.shape_cast %186 : vector<1x2x32xf32> to vector<2x32xf32>
    %188 = vector.shape_cast %185 : vector<2x32xf32> to vector<1x2x32xf32>
    tpu.vector_store %arg5[%c1_46, %c0_47, %c0_48], %188 {strides = array<i32>} : memref<2x2x32xf32, #tpu.memory_space<vmem>>, vector<1x2x32xf32>,
    %189 = vector.extract_strided_slice %179 {offsets = [0, 0], sizes = [2, 32], strides = [1, 1]} : vector<2x64xf32> to vector<2x32xf32>
    %c0_49 = arith.constant 0 : index
    %c0_50 = arith.constant 0 : index
    %c0_51 = arith.constant 0 : index
    %190 = vector.load %arg6[%c0_49, %c0_50, %c0_51] : memref<2x2x32xf32, #tpu.memory_space<vmem>>, vector<1x2x32xf32>
    %191 = vector.shape_cast %190 : vector<1x2x32xf32> to vector<2x32xf32>
    %192 = vector.shape_cast %189 : vector<2x32xf32> to vector<1x2x32xf32>
    tpu.vector_store %arg6[%c0_49, %c0_50, %c0_51], %192 {strides = array<i32>} : memref<2x2x32xf32, #tpu.memory_space<vmem>>, vector<1x2x32xf32>,
    %193 = vector.extract_strided_slice %179 {offsets = [0, 32], sizes = [2, 32], strides = [1, 1]} : vector<2x64xf32> to vector<2x32xf32>
    %c1_52 = arith.constant 1 : index
    %c0_53 = arith.constant 0 : index
    %c0_54 = arith.constant 0 : index
    %194 = vector.load %arg6[%c1_52, %c0_53, %c0_54] : memref<2x2x32xf32, #tpu.memory_space<vmem>>, vector<1x2x32xf32>
    %195 = vector.shape_cast %194 : vector<1x2x32xf32> to vector<2x32xf32>
    %196 = vector.shape_cast %193 : vector<2x32xf32> to vector<1x2x32xf32>
    tpu.vector_store %arg6[%c1_52, %c0_53, %c0_54], %196 {strides = array<i32>} : memref<2x2x32xf32, #tpu.memory_space<vmem>>, vector<1x2x32xf32>,
    %197 = tpu.concatenate %66, %82, %98, %114, %130, %146, %162, %180 in 0 : vector<2x64xf32>, vector<2x64xf32>, vector<2x64xf32>, vector<2x64xf32>, vector<2x64xf32>, vector<2x64xf32>, vector<2x64xf32>, vector<2x64xf32> -> vector<16x64xf32>
    %c128 = arith.constant 128 : index
    %c0_55 = arith.constant 0 : index
    %198 = vector.load %arg1[%c128, %c0_55] : memref<192x256xf32, #tpu.memory_space<vmem>>, vector<64x128xf32>
    %cst_56 = arith.constant dense<0.000000e+00> : vector<16x128xf32>
    %199 = tpu.matmul %197, %198, %cst_56 {dimension_numbers = #tpu.dot_dimension_numbers<[1], [0], [0], [1], [0, 0, 1, 1], [], []>} : vector<16x64xf32>, vector<64x128xf32>, vector<16x128xf32> -> vector<16x128xf32>
    %200 = tpu.iota {dimensions = array<i32: 1>} : vector<16x128xi32>
    %c2_i32 = arith.constant 2 : i32
    %201 = vector.broadcast %c2_i32 : i32 to vector<16x128xi32>
    %202 = arith.cmpi sge, %200, %201 : vector<16x128xi32>
    %c8_i32 = arith.constant 8 : i32
    %203 = vector.broadcast %c8_i32 : i32 to vector<16x128xi32>
    %204 = arith.cmpi slt, %200, %203 : vector<16x128xi32>
    %205 = arith.andi %202, %204 : vector<16x128xi1>
    %c8_i32_57 = arith.constant 8 : i32
    %206 = vector.broadcast %c8_i32_57 : i32 to vector<16x128xi32>
    %207 = arith.cmpi sge, %200, %206 : vector<16x128xi32>
    %c40_i32 = arith.constant 40 : i32
    %208 = vector.broadcast %c40_i32 : i32 to vector<16x128xi32>
    %209 = arith.cmpi slt, %200, %208 : vector<16x128xi32>
    %210 = arith.andi %207, %209 : vector<16x128xi1>
    %c2_i32_58 = arith.constant 2 : i32
    %211 = vector.broadcast %c2_i32_58 : i32 to vector<16x128xi32>
    %212 = arith.cmpi slt, %200, %211 : vector<16x128xi32>
    %c40_i32_59 = arith.constant 40 : i32
    %213 = vector.broadcast %c40_i32_59 : i32 to vector<16x128xi32>
    %214 = arith.cmpi sge, %200, %213 : vector<16x128xi32>
    %c42_i32 = arith.constant 42 : i32
    %215 = vector.broadcast %c42_i32 : i32 to vector<16x128xi32>
    %216 = arith.cmpi slt, %200, %215 : vector<16x128xi32>
    %217 = arith.andi %214, %216 : vector<16x128xi1>
    %218 = arith.ori %212, %217 : vector<16x128xi1>
    %cst_60 = arith.constant -1.000000e+30 : f32
    %219 = vector.broadcast %cst_60 : f32 to vector<16x128xf32>
    %220 = arith.select %218, %199, %219 : vector<16x128xi1>, vector<16x128xf32>
    %cst_61 = arith.constant dense<0xFF800000> : vector<16xf32>
    %221 = vector.multi_reduction <maximumf>, %220, %cst_61 [1] : vector<16x128xf32> to vector<16xf32>
    %222 = vector.shape_cast %221 : vector<16xf32> to vector<16x1xf32>
    %cst_62 = arith.constant -1.000000e+30 : f32
    %223 = vector.broadcast %cst_62 : f32 to vector<16x128xf32>
    %224 = arith.select %205, %199, %223 : vector<16x128xi1>, vector<16x128xf32>
    %cst_63 = arith.constant dense<0xFF800000> : vector<16xf32>
    %225 = vector.multi_reduction <maximumf>, %224, %cst_63 [1] : vector<16x128xf32> to vector<16xf32>
    %226 = vector.shape_cast %225 : vector<16xf32> to vector<16x1xf32>
    %cst_64 = arith.constant -1.000000e+30 : f32
    %227 = vector.broadcast %cst_64 : f32 to vector<16x128xf32>
    %228 = arith.select %210, %199, %227 : vector<16x128xi1>, vector<16x128xf32>
    %cst_65 = arith.constant dense<0xFF800000> : vector<16xf32>
    %229 = vector.multi_reduction <maximumf>, %228, %cst_65 [1] : vector<16x128xf32> to vector<16xf32>
    %230 = vector.shape_cast %229 : vector<16xf32> to vector<16x1xf32>
    %231 = vector.shape_cast %230 : vector<16x1xf32> to vector<16x1xf32>
    %232 = vector.broadcast %231 : vector<16x1xf32> to vector<16x128xf32>
    %233 = vector.shape_cast %222 : vector<16x1xf32> to vector<16x1xf32>
    %234 = vector.broadcast %233 : vector<16x1xf32> to vector<16x128xf32>
    %235 = arith.select %210, %232, %234 : vector<16x128xi1>, vector<16x128xf32>
    %236 = vector.shape_cast %226 : vector<16x1xf32> to vector<16x1xf32>
    %237 = vector.broadcast %236 : vector<16x1xf32> to vector<16x128xf32>
    %238 = arith.select %205, %237, %235 : vector<16x128xi1>, vector<16x128xf32>
    %239 = arith.subf %199, %238 : vector<16x128xf32>
    %240 = math.exp %239 : vector<16x128xf32>
    %cst_66 = arith.constant 0.000000e+00 : f32
    %241 = vector.broadcast %cst_66 : f32 to vector<16x128xf32>
    %242 = arith.select %218, %240, %241 : vector<16x128xi1>, vector<16x128xf32>
    %cst_67 = arith.constant dense<0.000000e+00> : vector<16xf32>
    %243 = vector.multi_reduction <add>, %242, %cst_67 [1] : vector<16x128xf32> to vector<16xf32>
    %244 = vector.shape_cast %243 : vector<16xf32> to vector<16x1xf32>
    %cst_68 = arith.constant 0.000000e+00 : f32
    %245 = vector.broadcast %cst_68 : f32 to vector<16x128xf32>
    %246 = arith.select %205, %240, %245 : vector<16x128xi1>, vector<16x128xf32>
    %cst_69 = arith.constant dense<0.000000e+00> : vector<16xf32>
    %247 = vector.multi_reduction <add>, %246, %cst_69 [1] : vector<16x128xf32> to vector<16xf32>
    %248 = vector.shape_cast %247 : vector<16xf32> to vector<16x1xf32>
    %cst_70 = arith.constant 0.000000e+00 : f32
    %249 = vector.broadcast %cst_70 : f32 to vector<16x128xf32>
    %250 = arith.select %210, %240, %249 : vector<16x128xi1>, vector<16x128xf32>
    %cst_71 = arith.constant dense<0.000000e+00> : vector<16xf32>
    %251 = vector.multi_reduction <add>, %250, %cst_71 [1] : vector<16x128xf32> to vector<16xf32>
    %252 = vector.shape_cast %251 : vector<16xf32> to vector<16x1xf32>
    %253 = vector.shape_cast %252 : vector<16x1xf32> to vector<16x1xf32>
    %254 = vector.broadcast %253 : vector<16x1xf32> to vector<16x128xf32>
    %255 = vector.shape_cast %244 : vector<16x1xf32> to vector<16x1xf32>
    %256 = vector.broadcast %255 : vector<16x1xf32> to vector<16x128xf32>
    %257 = arith.select %210, %254, %256 : vector<16x128xi1>, vector<16x128xf32>
    %258 = vector.shape_cast %248 : vector<16x1xf32> to vector<16x1xf32>
    %259 = vector.broadcast %258 : vector<16x1xf32> to vector<16x128xf32>
    %260 = arith.select %205, %259, %257 : vector<16x128xi1>, vector<16x128xf32>
    %261 = arith.subf %199, %238 : vector<16x128xf32>
    %262 = math.log %260 : vector<16x128xf32>
    %263 = arith.subf %261, %262 : vector<16x128xf32>
    %264 = vector.extract_strided_slice %263 {offsets = [0, 40], sizes = [16, 1], strides = [1, 1]} : vector<16x128xf32> to vector<16x1xf32>
    %265 = vector.extract_strided_slice %263 {offsets = [0, 41], sizes = [16, 1], strides = [1, 1]} : vector<16x128xf32> to vector<16x1xf32>
    %cst_72 = arith.constant 0.000000e+00 : f32
    %266 = vector.shape_cast %265 : vector<16x1xf32> to vector<16x1xf32>
    %267 = vector.broadcast %266 : vector<16x1xf32> to vector<16x128xf32>
    %268 = vector.broadcast %cst_72 : f32 to vector<16x128xf32>
    %269 = arith.select %210, %267, %268 : vector<16x128xi1>, vector<16x128xf32>
    %270 = vector.shape_cast %264 : vector<16x1xf32> to vector<16x1xf32>
    %271 = vector.broadcast %270 : vector<16x1xf32> to vector<16x128xf32>
    %272 = arith.select %205, %271, %269 : vector<16x128xi1>, vector<16x128xf32>
    %273 = arith.addf %263, %272 : vector<16x128xf32>
    %274 = vector.extract_strided_slice %273 {offsets = [0, 0], sizes = [16, 40], strides = [1, 1]} : vector<16x128xf32> to vector<16x40xf32>
    %c0_73 = arith.constant 0 : index
    %c0_74 = arith.constant 0 : index
    %275 = vector.load %arg4[%c0_73, %c0_74] : memref<16x40xf32, #tpu.memory_space<vmem>>, vector<16x40xf32>
    tpu.vector_store %arg4[%c0_73, %c0_74], %274 {strides = array<i32>} : memref<16x40xf32, #tpu.memory_space<vmem>>, vector<16x40xf32>,
    return
  }
}

</mosaic_0001>

<llo_original>
// kernel: lstm_model_forward.1
$region0: #{lstm_model_forward.1}
  #allocation0 [shape = 'u32[]', space=smem, size = 0x4, offset = 0x4, fixed_abs, tag = 'smem constant byte address 0x4 - core index']
  #allocation1 [shape = 'u32[144,128]{1,0:T(1,128)}', space=vmem, size = 0x12000, scoped, tag = 'internal scratch']
  #allocation2 [shape = 'f32[16,256]{1,0:T(8,128)}', space=vmem, size = 0x4000, scoped, tag = 'scratch operand']
  %s0 = inlined_call_operand.vmem [shape: s32[16,1], index: 0, kind: input, shape index: {}]
  %s1 = inlined_call_operand.hbm [shape: f32[192,256], index: 1, kind: input, shape index: {}]
  %s2 = inlined_call_operand.vmem [shape: f32[2,2,32], index: 2, kind: input, shape index: {}]
  %s3 = inlined_call_operand.vmem [shape: f32[2,2,32], index: 3, kind: input, shape index: {}]
  %s4 = inlined_call_operand.vmem [shape: f32[16,40], index: 4, kind: output, shape index: {0}]
  %s5 = inlined_call_operand.hbm [shape: f32[2,2,32], index: 5, kind: output, shape index: {1}]
  %s6 = inlined_call_operand.hbm [shape: f32[2,2,32], index: 6, kind: output, shape index: {2}]
  %7 = xla_tuple %s4, %s5, %s6
  %s8 = sld [smem:[#allocation0]]
  $region46: #{lstm_model_forward.1} parent=0
    _
  %s10 = ssub.s32 1, %s8
  %s11 = scalar_select 0, %s10, %s8
  $region1: #{lstm_model_forward.1} parent=0
    #allocation3 [shape = 'u8[196608]{0}', space=vmem, size = 0x30000, scoped, tag = 'input window, operand 1, single buffered']
    #allocation4 [shape = 's32[1]{0}', space=sflag, size = 0x4, scoped, tag = 'scoped memory for lstm_model_forward.1']
    #allocation5 [shape = 's32[1]{0}', space=sflag, size = 0x4, scoped, tag = 'scoped memory for lstm_model_forward.1']
    #allocation6 [shape = 'u8[2048]{0}', space=vmem, size = 0x800, scoped, tag = 'output window, operand 1, single buffered']
    #allocation7 [shape = 'u8[2048]{0}', space=vmem, size = 0x800, scoped, tag = 'output window, operand 2, single buffered']
    #allocation8 [shape = 's32[1]{0}', space=sflag, size = 0x4, scoped, tag = 'scoped memory for lstm_model_forward.1']
    %12 = vsyncpa [#allocation4], 0
    %13 = vsyncpa [#allocation5], 0
    %14 = vsyncpa [#allocation8], 0
    // Predicated region
    $region2: #{lstm_model_forward.1} parent=1 // pred_check
      _
    $region3: #{lstm_model_forward.1} parent=1 // pred_check_branch
      %16 = sbr.rel (0) target = $region5
    $region4: #{lstm_model_forward.1} parent=1 // pred_region
      _
    $region5: #{lstm_model_forward.1} parent=1 // pred_fallthru
      _
    // Predicated region
    $region6: #{lstm_model_forward.1} parent=1 // pred_check
      _
    $region7: #{lstm_model_forward.1} parent=1 // pred_check_branch
      %18 = sbr.rel (0) target = $region9
    $region8: #{lstm_model_forward.1} parent=1 // pred_region
      %s20 = ssub.s32 6144, 6144
      %21 = vsyncadd [#allocation4], %s20
      %s22 = sshll.u32 [#allocation3], 4
      %s23 = int_to_ptr.vmem [resolvable:$true] %s22
      %28 = dma.hbm_to_vmem [thread:$0]  %s1, 6144, %s23, [#allocation4], 256, 256, 16
    $region9: #{lstm_model_forward.1} parent=1 // pred_fallthru
      _
    // Predicated region
    $region10: #{lstm_model_forward.1} parent=1 // pred_check
      _
    $region11: #{lstm_model_forward.1} parent=1 // pred_check_branch
      %30 = sbr.rel (0) target = $region13
    $region12: #{lstm_model_forward.1} parent=1 // pred_region
      _
    $region13: #{lstm_model_forward.1} parent=1 // pred_fallthru
      _
    // Predicated region
    $region14: #{lstm_model_forward.1} parent=1 // pred_check
      _
    $region15: #{lstm_model_forward.1} parent=1 // pred_check_branch
      %32 = sbr.rel (0) target = $region17
    $region16: #{lstm_model_forward.1} parent=1 // pred_region
      _
    $region17: #{lstm_model_forward.1} parent=1 // pred_fallthru
      _
    // Predicated region
    $region18: #{lstm_model_forward.1} parent=1 // pred_check
      _
    $region19: #{lstm_model_forward.1} parent=1 // pred_check_branch
      %34 = sbr.rel (0) target = $region21
    $region20: #{lstm_model_forward.1} parent=1 // pred_region
      %35 = dma.done [#allocation4], 6144
    $region21: #{lstm_model_forward.1} parent=1 // pred_fallthru
      _
    %v36 = vld [vmem:[#allocation3] sm:$0xff]
    %v37 = vld [vmem:[#allocation3 + $0x8] sm:$0xff]
    %v38 = vld [vmem:[#allocation3 + $0x10] sm:$0xff]
    %v39 = vld [vmem:[#allocation3 + $0x18] sm:$0xff]
    %v40 = vld [vmem:[#allocation3 + $0x20] sm:$0xff]
    %v41 = vld [vmem:[#allocation3 + $0x28] sm:$0xff]
    %v42 = vld [vmem:[#allocation3 + $0x30] sm:$0xff]
    %v43 = vld [vmem:[#allocation3 + $0x38] sm:$0xff]
    %v44 = vld [vmem:[#allocation3 + $0x40] sm:$0xff]
    %v45 = vld [vmem:[#allocation3 + $0x48] sm:$0xff]
    %v46 = vld [vmem:[#allocation3 + $0x50] sm:$0xff]
    %v47 = vld [vmem:[#allocation3 + $0x58] sm:$0xff]
    %v48 = vld [vmem:[#allocation3 + $0x60] sm:$0xff]
    %v49 = vld [vmem:[#allocation3 + $0x68] sm:$0xff]
    %v50 = vld [vmem:[#allocation3 + $0x70] sm:$0xff]
    %v51 = vld [vmem:[#allocation3 + $0x78] sm:$0xff]
    %v52 = vld [vmem:[%s0] sm:$0xff]
    %v53 = vld [vmem:[%s0 + $0x8] sm:$0xff]
    %v54 = vlaneseq
    %v55 = vand.u32 %v54, 127
    %56 = vset.pattern.permute.xlu0 0
    %57 = vperm.xlu0 %56, %v52
    %v58 = vpop.permute.xlu0 %57
    %59 = vset.pattern.permute.xlu0 0
    %60 = vperm.xlu0 %59, %v53
    %v61 = vpop.permute.xlu0 %60
    %vm62 = vcmp.eq.s32.totalorder %v55, %v58
    %vm63 = vcmp.eq.s32.totalorder %v55, %v61
    %v64 = vsel %vm62, 1.0, 0.0
    %v65 = vsel %vm63, 1.0, 0.0
    %vm66 = vcmask 523264
    %v68 = vsel %vm66, %v64, 0
    %v71 = vsel %vm66, %v65, 0
    %73 = vmatprep.subr.mxu0 0.0
    %74 = vmatpush1.msra.mxu0 0.0
    %75 = vmatprep.subr.mxu0 0.0
    %76 = vmatpush1.msra.mxu0 0.0
    %77 = vmatprep.subr.mxu0 0.0
    %78 = vmatpush1.msra.mxu0 0.0
    %79 = vmatprep.subr.mxu0 0.0
    %80 = vmatpush1.msra.mxu0 0.0
    %81 = vmatprep.subr.mxu0 0.0
    %82 = vmatpush1.msra.mxu0 0.0
    %83 = vmatprep.subr.mxu0 0.0
    %84 = vmatpush1.msra.mxu0 0.0
    %85 = vmatprep.subr.mxu0 0.0
    %86 = vmatpush1.msra.mxu0 0.0
    %87 = vmatprep.subr.mxu0 0.0
    %88 = vmatpush1.msra.mxu0 0.0
    %89 = vmatprep.subr.mxu0 %v51
    %90 = vmatpush1.msra.mxu0 %v50
    %91 = vmatprep.subr.mxu0 %v49
    %92 = vmatpush1.msra.mxu0 %v48
    %93 = vmatprep.subr.mxu0 %v47
    %94 = vmatpush1.msra.mxu0 %v46
    %95 = vmatprep.subr.mxu0 %v45
    %96 = vmatpush1.msra.mxu0 %v44
    %97 = vmatprep.subr.mxu0 %v43
    %98 = vmatpush1.msra.mxu0 %v42
    %99 = vmatprep.subr.mxu0 %v41
    %100 = vmatpush1.msra.mxu0 %v40
    %101 = vmatprep.subr.mxu0 %v39
    %102 = vmatpush1.msra.mxu0 %v38
    %103 = vmatprep.subr.mxu0 %v37
    %104 = vmatpush1.msra.mxu0 %v36
    %105 = vmatprep.subr.mxu0 0.0
    %106 = vmatpush2.msra.mxu0 0.0
    %107 = vmatprep.subr.mxu0 0.0
    %108 = vmatpush2.msra.mxu0 0.0
    %109 = vmatprep.subr.mxu0 0.0
    %110 = vmatpush2.msra.mxu0 0.0
    %111 = vmatprep.subr.mxu0 0.0
    %112 = vmatpush2.msra.mxu0 0.0
    %113 = vmatprep.subr.mxu0 0.0
    %114 = vmatpush2.msra.mxu0 0.0
    %115 = vmatprep.subr.mxu0 0.0
    %116 = vmatpush2.msra.mxu0 0.0
    %117 = vmatprep.subr.mxu0 0.0
    %118 = vmatpush2.msra.mxu0 0.0
    %119 = vmatprep.subr.mxu0 0.0
    %120 = vmatpush2.msra.mxu0 0.0
    %121 = vmatprep.subr.mxu0 0.0
    %122 = vmatpush2.msra.mxu0 0.0
    %123 = vmatprep.subr.mxu0 0.0
    %124 = vmatpush2.msra.mxu0 0.0
    %125 = vmatprep.subr.mxu0 0.0
    %126 = vmatpush2.msra.mxu0 0.0
    %127 = vmatprep.subr.mxu0 0.0
    %128 = vmatpush2.msra.mxu0 0.0
    %129 = vmatprep.subr.mxu0 0.0
    %130 = vmatpush2.msra.mxu0 0.0
    %131 = vmatprep.subr.mxu0 0.0
    %132 = vmatpush2.msra.mxu0 0.0
    %133 = vmatprep.subr.mxu0 0.0
    %134 = vmatpush2.msra.mxu0 0.0
    %135 = vmatprep.subr.mxu0 0.0
    %136 = vmatpush2.msra.mxu0 0.0
    %137 = vmatprep.mubr.f32.mxu0 0.0
    %138 = vmatmul.mubr.f32.gmra.mxu0 %v68
    %v139 = vpop.f32.mrf.mxu0
    %v140 = vadd.f32 0.0, %v139
    %v141 = vpop.f32.mrf.mxu0
    %v142 = vadd.f32 0.0, %v141
    %143 = vmatprep.mubr.f32.mxu0 0.0
    %144 = vmatmul.mubr.f32.gmra.mxu0 %v71
    %v145 = vpop.f32.mrf.mxu0
    %v146 = vadd.f32 0.0, %v145
    %v147 = vpop.f32.mrf.mxu0
    %v148 = vadd.f32 0.0, %v147
    %149 = vdwg.mxu0
    %150 = vst [vmem:[#allocation2] sm:$0xff] %v140
    %151 = vst [vmem:[#allocation2 + $0x8] sm:$0xff] %v142
    %152 = vst [vmem:[#allocation2 + $0x10] sm:$0xff] %v146
    %153 = vst [vmem:[#allocation2 + $0x18] sm:$0xff] %v148
    %v154 = vadd.s32 %v55, 128
    %vm155 = vcmp.ge.s32.totalorder %v55, 192
    %vm156 = vcmp.ge.s32.totalorder %v154, 192
    %v157 = vsel %vm155, 1.0, 0.5
    %v158 = vsel %vm156, 1.0, 0.5
    %v159 = vsel %vm155, 0.0, 0.5
    %v160 = vsel %vm156, 0.0, 0.5
    %vm161 = vcmp.lt.s32.totalorder %v55, 32
    %v162 = vld [vmem:[%s2] sm:$0x3]
    %s163 = scalar_lea.vmem %s2, 2
    %v164 = vld [vmem:[%s163] sm:$0x3]
    %166 = vrot.lane.b32.xlu0 %v164, 32
    %v167 = vpop.permute.xlu0 %166
    %vm169 = vcmask 261120
    %v170 = vsel %vm169, %v162, %v167
    %v171 = vld [vmem:[%s3] sm:$0x3]
    %s172 = scalar_lea.vmem %s3, 2
    %v173 = vld [vmem:[%s172] sm:$0x3]
    %175 = vrot.lane.b32.xlu0 %v173, 32
    %v176 = vpop.permute.xlu0 %175
    %v178 = vsel %vm169, %v171, %v176
    %v179 = vld [vmem:[#allocation3 + $0x80] sm:$0xff]
    %v180 = vld [vmem:[#allocation3 + $0x88] sm:$0xff]
    %v181 = vld [vmem:[#allocation3 + $0x90] sm:$0xff]
    %v182 = vld [vmem:[#allocation3 + $0x98] sm:$0xff]
    %v183 = vld [vmem:[#allocation3 + $0xa0] sm:$0xff]
    %v184 = vld [vmem:[#allocation3 + $0xa8] sm:$0xff]
    %v185 = vld [vmem:[#allocation3 + $0xb0] sm:$0xff]
    %v186 = vld [vmem:[#allocation3 + $0xb8] sm:$0xff]
    %v187 = vld [vmem:[#allocation3 + $0xc0] sm:$0xff]
    %v188 = vld [vmem:[#allocation3 + $0xc8] sm:$0xff]
    %v189 = vld [vmem:[#allocation3 + $0xd0] sm:$0xff]
    %v190 = vld [vmem:[#allocation3 + $0xd8] sm:$0xff]
    %v191 = vld [vmem:[#allocation3 + $0xe0] sm:$0xff]
    %v192 = vld [vmem:[#allocation3 + $0xe8] sm:$0xff]
    %v193 = vld [vmem:[#allocation3 + $0xf0] sm:$0xff]
    %v194 = vld [vmem:[#allocation3 + $0xf8] sm:$0xff]
    %v195 = vld [vmem:[#allocation2] sm:$0x3]
    %v196 = vld [vmem:[#allocation2 + $0x8] sm:$0x3]
    %v198 = vsel %vm66, %v170, 0
    %200 = vmatprep.subr.mxu0 0.0
    %201 = vmatpush1.msra.mxu0 0.0
    %202 = vmatprep.subr.mxu0 0.0
    %203 = vmatpush1.msra.mxu0 0.0
    %204 = vmatprep.subr.mxu0 0.0
    %205 = vmatpush1.msra.mxu0 0.0
    %206 = vmatprep.subr.mxu0 0.0
    %207 = vmatpush1.msra.mxu0 0.0
    %208 = vmatprep.subr.mxu0 0.0
    %209 = vmatpush1.msra.mxu0 0.0
    %210 = vmatprep.subr.mxu0 0.0
    %211 = vmatpush1.msra.mxu0 0.0
    %212 = vmatprep.subr.mxu0 0.0
    %213 = vmatpush1.msra.mxu0 0.0
    %214 = vmatprep.subr.mxu0 0.0
    %215 = vmatpush1.msra.mxu0 0.0
    %216 = vmatprep.subr.mxu0 %v194
    %217 = vmatpush1.msra.mxu0 %v193
    %218 = vmatprep.subr.mxu0 %v192
    %219 = vmatpush1.msra.mxu0 %v191
    %220 = vmatprep.subr.mxu0 %v190
    %221 = vmatpush1.msra.mxu0 %v189
    %222 = vmatprep.subr.mxu0 %v188
    %223 = vmatpush1.msra.mxu0 %v187
    %224 = vmatprep.subr.mxu0 %v186
    %225 = vmatpush1.msra.mxu0 %v185
    %226 = vmatprep.subr.mxu0 %v184
    %227 = vmatpush1.msra.mxu0 %v183
    %228 = vmatprep.subr.mxu0 %v182
    %229 = vmatpush1.msra.mxu0 %v181
    %230 = vmatprep.subr.mxu0 %v180
    %231 = vmatpush1.msra.mxu0 %v179
    %232 = vmatprep.subr.mxu0 0.0
    %233 = vmatpush2.msra.mxu0 0.0
    %234 = vmatprep.subr.mxu0 0.0
    %235 = vmatpush2.msra.mxu0 0.0
    %236 = vmatprep.subr.mxu0 0.0
    %237 = vmatpush2.msra.mxu0 0.0
    %238 = vmatprep.subr.mxu0 0.0
    %239 = vmatpush2.msra.mxu0 0.0
    %240 = vmatprep.subr.mxu0 0.0
    %241 = vmatpush2.msra.mxu0 0.0
    %242 = vmatprep.subr.mxu0 0.0
    %243 = vmatpush2.msra.mxu0 0.0
    %244 = vmatprep.subr.mxu0 0.0
    %245 = vmatpush2.msra.mxu0 0.0
    %246 = vmatprep.subr.mxu0 0.0
    %247 = vmatpush2.msra.mxu0 0.0
    %248 = vmatprep.subr.mxu0 0.0
    %249 = vmatpush2.msra.mxu0 0.0
    %250 = vmatprep.subr.mxu0 0.0
    %251 = vmatpush2.msra.mxu0 0.0
    %252 = vmatprep.subr.mxu0 0.0
    %253 = vmatpush2.msra.mxu0 0.0
    %254 = vmatprep.subr.mxu0 0.0
    %255 = vmatpush2.msra.mxu0 0.0
    %256 = vmatprep.subr.mxu0 0.0
    %257 = vmatpush2.msra.mxu0 0.0
    %258 = vmatprep.subr.mxu0 0.0
    %259 = vmatpush2.msra.mxu0 0.0
    %260 = vmatprep.subr.mxu0 0.0
    %261 = vmatpush2.msra.mxu0 0.0
    %262 = vmatprep.subr.mxu0 0.0
    %263 = vmatpush2.msra.mxu0 0.0
    %264 = vmatprep.mubr.f32.mxu0 0.0
    %265 = vmatmul.mubr.f32.gmra.mxu0 %v198
    %v266 = vpop.f32.mrf.mxu0
    %v267 = vadd.f32 %v195, %v266
    %v268 = vpop.f32.mrf.mxu0
    %v269 = vadd.f32 %v196, %v268
    %270 = vdwg.mxu0
    %v271 = vmul.f32 %v267, %v157
    %v272 = vmul.f32 %v269, %v158
    %v273 = vtanh.pop %v271
    %v274 = vtanh.pop %v272
    %v275 = vmul.f32 %v273, %v157
    %v276 = vmul.f32 %v274, %v158
    %v277 = vadd.f32 %v275, %v159
    %v278 = vadd.f32 %v276, %v160
    %v279 = vmul.f32 %v277, %v178
    %v280 = vmul.f32 %v277, %v278
    %282 = vrot.lane.b32.xlu0 %v280, 64
    %v283 = vpop.permute.xlu0 %282
    %v285 = vadd.f32 %v279, %v283
    %v286 = vtanh.pop %v285
    %v287 = vmul.f32 %v278, %v286
    %v288 = vsel %vm161, %v285, %v178
    %v289 = vsel %vm161, %v287, %v170
    %v290 = vld [vmem:[#allocation2] sm:$0xc]
    %v291 = vld [vmem:[#allocation2 + $0x8] sm:$0xc]
    %v294 = vrot.slane %v290, 2
    %v295 = vrot.slane %v291, 2
    %v299 = vsel %vm66, %v289, 0
    %301 = vmatprep.subr.mxu0 0.0
    %302 = vmatpush1.msra.mxu0 0.0
    %303 = vmatprep.subr.mxu0 0.0
    %304 = vmatpush1.msra.mxu0 0.0
    %305 = vmatprep.subr.mxu0 0.0
    %306 = vmatpush1.msra.mxu0 0.0
    %307 = vmatprep.subr.mxu0 0.0
    %308 = vmatpush1.msra.mxu0 0.0
    %309 = vmatprep.subr.mxu0 0.0
    %310 = vmatpush1.msra.mxu0 0.0
    %311 = vmatprep.subr.mxu0 0.0
    %312 = vmatpush1.msra.mxu0 0.0
    %313 = vmatprep.subr.mxu0 0.0
    %314 = vmatpush1.msra.mxu0 0.0
    %315 = vmatprep.subr.mxu0 0.0
    %316 = vmatpush1.msra.mxu0 0.0
    %317 = vmatprep.subr.mxu0 %v194
    %318 = vmatpush1.msra.mxu0 %v193
    %319 = vmatprep.subr.mxu0 %v192
    %320 = vmatpush1.msra.mxu0 %v191
    %321 = vmatprep.subr.mxu0 %v190
    %322 = vmatpush1.msra.mxu0 %v189
    %323 = vmatprep.subr.mxu0 %v188
    %324 = vmatpush1.msra.mxu0 %v187
    %325 = vmatprep.subr.mxu0 %v186
    %326 = vmatpush1.msra.mxu0 %v185
    %327 = vmatprep.subr.mxu0 %v184
    %328 = vmatpush1.msra.mxu0 %v183
    %329 = vmatprep.subr.mxu0 %v182
    %330 = vmatpush1.msra.mxu0 %v181
    %331 = vmatprep.subr.mxu0 %v180
    %332 = vmatpush1.msra.mxu0 %v179
    %333 = vmatprep.subr.mxu0 0.0
    %334 = vmatpush2.msra.mxu0 0.0
    %335 = vmatprep.subr.mxu0 0.0
    %336 = vmatpush2.msra.mxu0 0.0
    %337 = vmatprep.subr.mxu0 0.0
    %338 = vmatpush2.msra.mxu0 0.0
    %339 = vmatprep.subr.mxu0 0.0
    %340 = vmatpush2.msra.mxu0 0.0
    %341 = vmatprep.subr.mxu0 0.0
    %342 = vmatpush2.msra.mxu0 0.0
    %343 = vmatprep.subr.mxu0 0.0
    %344 = vmatpush2.msra.mxu0 0.0
    %345 = vmatprep.subr.mxu0 0.0
    %346 = vmatpush2.msra.mxu0 0.0
    %347 = vmatprep.subr.mxu0 0.0
    %348 = vmatpush2.msra.mxu0 0.0
    %349 = vmatprep.subr.mxu0 0.0
    %350 = vmatpush2.msra.mxu0 0.0
    %351 = vmatprep.subr.mxu0 0.0
    %352 = vmatpush2.msra.mxu0 0.0
    %353 = vmatprep.subr.mxu0 0.0
    %354 = vmatpush2.msra.mxu0 0.0
    %355 = vmatprep.subr.mxu0 0.0
    %356 = vmatpush2.msra.mxu0 0.0
    %357 = vmatprep.subr.mxu0 0.0
    %358 = vmatpush2.msra.mxu0 0.0
    %359 = vmatprep.subr.mxu0 0.0
    %360 = vmatpush2.msra.mxu0 0.0
    %361 = vmatprep.subr.mxu0 0.0
    %362 = vmatpush2.msra.mxu0 0.0
    %363 = vmatprep.subr.mxu0 0.0
    %364 = vmatpush2.msra.mxu0 0.0
    %365 = vmatprep.mubr.f32.mxu0 0.0
    %366 = vmatmul.mubr.f32.gmra.mxu0 %v299
    %v367 = vpop.f32.mrf.mxu0
    %v368 = vadd.f32 %v294, %v367
    %v369 = vpop.f32.mrf.mxu0
    %v370 = vadd.f32 %v295, %v369
    %371 = vdwg.mxu0
    %v372 = vmul.f32 %v368, %v157
    %v373 = vmul.f32 %v370, %v158
    %v374 = vtanh.pop %v372
    %v375 = vtanh.pop %v373
    %v376 = vmul.f32 %v374, %v157
    %v377 = vmul.f32 %v375, %v158
    %v378 = vadd.f32 %v376, %v159
    %v379 = vadd.f32 %v377, %v160
    %v380 = vmul.f32 %v378, %v288
    %v381 = vmul.f32 %v378, %v379
    %383 = vrot.lane.b32.xlu0 %v381, 64
    %v384 = vpop.permute.xlu0 %383
    %v386 = vadd.f32 %v380, %v384
    %v387 = vtanh.pop %v386
    %v388 = vmul.f32 %v379, %v387
    %v389 = vld [vmem:[#allocation2] sm:$0x30]
    %v390 = vld [vmem:[#allocation2 + $0x8] sm:$0x30]
    %v393 = vrot.slane %v389, 4
    %v394 = vrot.slane %v390, 4
    %v398 = vsel %vm66, %v388, 0
    %400 = vmatprep.subr.mxu0 0.0
    %401 = vmatpush1.msra.mxu0 0.0
    %402 = vmatprep.subr.mxu0 0.0
    %403 = vmatpush1.msra.mxu0 0.0
    %404 = vmatprep.subr.mxu0 0.0
    %405 = vmatpush1.msra.mxu0 0.0
    %406 = vmatprep.subr.mxu0 0.0
    %407 = vmatpush1.msra.mxu0 0.0
    %408 = vmatprep.subr.mxu0 0.0
    %409 = vmatpush1.msra.mxu0 0.0
    %410 = vmatprep.subr.mxu0 0.0
    %411 = vmatpush1.msra.mxu0 0.0
    %412 = vmatprep.subr.mxu0 0.0
    %413 = vmatpush1.msra.mxu0 0.0
    %414 = vmatprep.subr.mxu0 0.0
    %415 = vmatpush1.msra.mxu0 0.0
    %416 = vmatprep.subr.mxu0 %v194
    %417 = vmatpush1.msra.mxu0 %v193
    %418 = vmatprep.subr.mxu0 %v192
    %419 = vmatpush1.msra.mxu0 %v191
    %420 = vmatprep.subr.mxu0 %v190
    %421 = vmatpush1.msra.mxu0 %v189
    %422 = vmatprep.subr.mxu0 %v188
    %423 = vmatpush1.msra.mxu0 %v187
    %424 = vmatprep.subr.mxu0 %v186
    %425 = vmatpush1.msra.mxu0 %v185
    %426 = vmatprep.subr.mxu0 %v184
    %427 = vmatpush1.msra.mxu0 %v183
    %428 = vmatprep.subr.mxu0 %v182
    %429 = vmatpush1.msra.mxu0 %v181
    %430 = vmatprep.subr.mxu0 %v180
    %431 = vmatpush1.msra.mxu0 %v179
    %432 = vmatprep.subr.mxu0 0.0
    %433 = vmatpush2.msra.mxu0 0.0
    %434 = vmatprep.subr.mxu0 0.0
    %435 = vmatpush2.msra.mxu0 0.0
    %436 = vmatprep.subr.mxu0 0.0
    %437 = vmatpush2.msra.mxu0 0.0
    %438 = vmatprep.subr.mxu0 0.0
    %439 = vmatpush2.msra.mxu0 0.0
    %440 = vmatprep.subr.mxu0 0.0
    %441 = vmatpush2.msra.mxu0 0.0
    %442 = vmatprep.subr.mxu0 0.0
    %443 = vmatpush2.msra.mxu0 0.0
    %444 = vmatprep.subr.mxu0 0.0
    %445 = vmatpush2.msra.mxu0 0.0
    %446 = vmatprep.subr.mxu0 0.0
    %447 = vmatpush2.msra.mxu0 0.0
    %448 = vmatprep.subr.mxu0 0.0
    %449 = vmatpush2.msra.mxu0 0.0
    %450 = vmatprep.subr.mxu0 0.0
    %451 = vmatpush2.msra.mxu0 0.0
    %452 = vmatprep.subr.mxu0 0.0
    %453 = vmatpush2.msra.mxu0 0.0
    %454 = vmatprep.subr.mxu0 0.0
    %455 = vmatpush2.msra.mxu0 0.0
    %456 = vmatprep.subr.mxu0 0.0
    %457 = vmatpush2.msra.mxu0 0.0
    %458 = vmatprep.subr.mxu0 0.0
    %459 = vmatpush2.msra.mxu0 0.0
    %460 = vmatprep.subr.mxu0 0.0
    %461 = vmatpush2.msra.mxu0 0.0
    %462 = vmatprep.subr.mxu0 0.0
    %463 = vmatpush2.msra.mxu0 0.0
    %464 = vmatprep.mubr.f32.mxu0 0.0
    %465 = vmatmul.mubr.f32.gmra.mxu0 %v398
    %v466 = vpop.f32.mrf.mxu0
    %v467 = vadd.f32 %v393, %v466
    %v468 = vpop.f32.mrf.mxu0
    %v469 = vadd.f32 %v394, %v468
    %470 = vdwg.mxu0
    %v471 = vmul.f32 %v467, %v157
    %v472 = vmul.f32 %v469, %v158
    %v473 = vtanh.pop %v471
    %v474 = vtanh.pop %v472
    %v475 = vmul.f32 %v473, %v157
    %v476 = vmul.f32 %v474, %v158
    %v477 = vadd.f32 %v475, %v159
    %v478 = vadd.f32 %v476, %v160
    %v479 = vmul.f32 %v477, %v386
    %v480 = vmul.f32 %v477, %v478
    %482 = vrot.lane.b32.xlu0 %v480, 64
    %v483 = vpop.permute.xlu0 %482
    %v485 = vadd.f32 %v479, %v483
    %v486 = vtanh.pop %v485
    %v487 = vmul.f32 %v478, %v486
    %v488 = vld [vmem:[#allocation2] sm:$0xc0]
    %v489 = vld [vmem:[#allocation2 + $0x8] sm:$0xc0]
    %v492 = vrot.slane %v488, 6
    %v493 = vrot.slane %v489, 6
    %v497 = vsel %vm66, %v487, 0
    %499 = vmatprep.subr.mxu0 0.0
    %500 = vmatpush1.msra.mxu0 0.0
    %501 = vmatprep.subr.mxu0 0.0
    %502 = vmatpush1.msra.mxu0 0.0
    %503 = vmatprep.subr.mxu0 0.0
    %504 = vmatpush1.msra.mxu0 0.0
    %505 = vmatprep.subr.mxu0 0.0
    %506 = vmatpush1.msra.mxu0 0.0
    %507 = vmatprep.subr.mxu0 0.0
    %508 = vmatpush1.msra.mxu0 0.0
    %509 = vmatprep.subr.mxu0 0.0
    %510 = vmatpush1.msra.mxu0 0.0
    %511 = vmatprep.subr.mxu0 0.0
    %512 = vmatpush1.msra.mxu0 0.0
    %513 = vmatprep.subr.mxu0 0.0
    %514 = vmatpush1.msra.mxu0 0.0
    %515 = vmatprep.subr.mxu0 %v194
    %516 = vmatpush1.msra.mxu0 %v193
    %517 = vmatprep.subr.mxu0 %v192
    %518 = vmatpush1.msra.mxu0 %v191
    %519 = vmatprep.subr.mxu0 %v190
    %520 = vmatpush1.msra.mxu0 %v189
    %521 = vmatprep.subr.mxu0 %v188
    %522 = vmatpush1.msra.mxu0 %v187
    %523 = vmatprep.subr.mxu0 %v186
    %524 = vmatpush1.msra.mxu0 %v185
    %525 = vmatprep.subr.mxu0 %v184
    %526 = vmatpush1.msra.mxu0 %v183
    %527 = vmatprep.subr.mxu0 %v182
    %528 = vmatpush1.msra.mxu0 %v181
    %529 = vmatprep.subr.mxu0 %v180
    %530 = vmatpush1.msra.mxu0 %v179
    %531 = vmatprep.subr.mxu0 0.0
    %532 = vmatpush2.msra.mxu0 0.0
    %533 = vmatprep.subr.mxu0 0.0
    %534 = vmatpush2.msra.mxu0 0.0
    %535 = vmatprep.subr.mxu0 0.0
    %536 = vmatpush2.msra.mxu0 0.0
    %537 = vmatprep.subr.mxu0 0.0
    %538 = vmatpush2.msra.mxu0 0.0
    %539 = vmatprep.subr.mxu0 0.0
    %540 = vmatpush2.msra.mxu0 0.0
    %541 = vmatprep.subr.mxu0 0.0
    %542 = vmatpush2.msra.mxu0 0.0
    %543 = vmatprep.subr.mxu0 0.0
    %544 = vmatpush2.msra.mxu0 0.0
    %545 = vmatprep.subr.mxu0 0.0
    %546 = vmatpush2.msra.mxu0 0.0
    %547 = vmatprep.subr.mxu0 0.0
    %548 = vmatpush2.msra.mxu0 0.0
    %549 = vmatprep.subr.mxu0 0.0
    %550 = vmatpush2.msra.mxu0 0.0
    %551 = vmatprep.subr.mxu0 0.0
    %552 = vmatpush2.msra.mxu0 0.0
    %553 = vmatprep.subr.mxu0 0.0
    %554 = vmatpush2.msra.mxu0 0.0
    %555 = vmatprep.subr.mxu0 0.0
    %556 = vmatpush2.msra.mxu0 0.0
    %557 = vmatprep.subr.mxu0 0.0
    %558 = vmatpush2.msra.mxu0 0.0
    %559 = vmatprep.subr.mxu0 0.0
    %560 = vmatpush2.msra.mxu0 0.0
    %561 = vmatprep.subr.mxu0 0.0
    %562 = vmatpush2.msra.mxu0 0.0
    %563 = vmatprep.mubr.f32.mxu0 0.0
    %564 = vmatmul.mubr.f32.gmra.mxu0 %v497
    %v565 = vpop.f32.mrf.mxu0
    %v566 = vadd.f32 %v492, %v565
    %v567 = vpop.f32.mrf.mxu0
    %v568 = vadd.f32 %v493, %v567
    %569 = vdwg.mxu0
    %v570 = vmul.f32 %v566, %v157
    %v571 = vmul.f32 %v568, %v158
    %v572 = vtanh.pop %v570
    %v573 = vtanh.pop %v571
    %v574 = vmul.f32 %v572, %v157
    %v575 = vmul.f32 %v573, %v158
    %v576 = vadd.f32 %v574, %v159
    %v577 = vadd.f32 %v575, %v160
    %v578 = vmul.f32 %v576, %v485
    %v579 = vmul.f32 %v576, %v577
    %581 = vrot.lane.b32.xlu0 %v579, 64
    %v582 = vpop.permute.xlu0 %581
    %v584 = vadd.f32 %v578, %v582
    %v585 = vtanh.pop %v584
    %v586 = vmul.f32 %v577, %v585
    %v587 = vld [vmem:[#allocation2 + $0x10] sm:$0x3]
    %v588 = vld [vmem:[#allocation2 + $0x18] sm:$0x3]
    %v590 = vsel %vm66, %v586, 0
    %592 = vmatprep.subr.mxu0 0.0
    %593 = vmatpush1.msra.mxu0 0.0
    %594 = vmatprep.subr.mxu0 0.0
    %595 = vmatpush1.msra.mxu0 0.0
    %596 = vmatprep.subr.mxu0 0.0
    %597 = vmatpush1.msra.mxu0 0.0
    %598 = vmatprep.subr.mxu0 0.0
    %599 = vmatpush1.msra.mxu0 0.0
    %600 = vmatprep.subr.mxu0 0.0
    %601 = vmatpush1.msra.mxu0 0.0
    %602 = vmatprep.subr.mxu0 0.0
    %603 = vmatpush1.msra.mxu0 0.0
    %604 = vmatprep.subr.mxu0 0.0
    %605 = vmatpush1.msra.mxu0 0.0
    %606 = vmatprep.subr.mxu0 0.0
    %607 = vmatpush1.msra.mxu0 0.0
    %608 = vmatprep.subr.mxu0 %v194
    %609 = vmatpush1.msra.mxu0 %v193
    %610 = vmatprep.subr.mxu0 %v192
    %611 = vmatpush1.msra.mxu0 %v191
    %612 = vmatprep.subr.mxu0 %v190
    %613 = vmatpush1.msra.mxu0 %v189
    %614 = vmatprep.subr.mxu0 %v188
    %615 = vmatpush1.msra.mxu0 %v187
    %616 = vmatprep.subr.mxu0 %v186
    %617 = vmatpush1.msra.mxu0 %v185
    %618 = vmatprep.subr.mxu0 %v184
    %619 = vmatpush1.msra.mxu0 %v183
    %620 = vmatprep.subr.mxu0 %v182
    %621 = vmatpush1.msra.mxu0 %v181
    %622 = vmatprep.subr.mxu0 %v180
    %623 = vmatpush1.msra.mxu0 %v179
    %624 = vmatprep.subr.mxu0 0.0
    %625 = vmatpush2.msra.mxu0 0.0
    %626 = vmatprep.subr.mxu0 0.0
    %627 = vmatpush2.msra.mxu0 0.0
    %628 = vmatprep.subr.mxu0 0.0
    %629 = vmatpush2.msra.mxu0 0.0
    %630 = vmatprep.subr.mxu0 0.0
    %631 = vmatpush2.msra.mxu0 0.0
    %632 = vmatprep.subr.mxu0 0.0
    %633 = vmatpush2.msra.mxu0 0.0
    %634 = vmatprep.subr.mxu0 0.0
    %635 = vmatpush2.msra.mxu0 0.0
    %636 = vmatprep.subr.mxu0 0.0
    %637 = vmatpush2.msra.mxu0 0.0
    %638 = vmatprep.subr.mxu0 0.0
    %639 = vmatpush2.msra.mxu0 0.0
    %640 = vmatprep.subr.mxu0 0.0
    %641 = vmatpush2.msra.mxu0 0.0
    %642 = vmatprep.subr.mxu0 0.0
    %643 = vmatpush2.msra.mxu0 0.0
    %644 = vmatprep.subr.mxu0 0.0
    %645 = vmatpush2.msra.mxu0 0.0
    %646 = vmatprep.subr.mxu0 0.0
    %647 = vmatpush2.msra.mxu0 0.0
    %648 = vmatprep.subr.mxu0 0.0
    %649 = vmatpush2.msra.mxu0 0.0
    %650 = vmatprep.subr.mxu0 0.0
    %651 = vmatpush2.msra.mxu0 0.0
    %652 = vmatprep.subr.mxu0 0.0
    %653 = vmatpush2.msra.mxu0 0.0
    %654 = vmatprep.subr.mxu0 0.0
    %655 = vmatpush2.msra.mxu0 0.0
    %656 = vmatprep.mubr.f32.mxu0 0.0
    %657 = vmatmul.mubr.f32.gmra.mxu0 %v590
    %v658 = vpop.f32.mrf.mxu0
    %v659 = vadd.f32 %v587, %v658
    %v660 = vpop.f32.mrf.mxu0
    %v661 = vadd.f32 %v588, %v660
    %662 = vdwg.mxu0
    %v663 = vmul.f32 %v659, %v157
    %v664 = vmul.f32 %v661, %v158
    %v665 = vtanh.pop %v663
    %v666 = vtanh.pop %v664
    %v667 = vmul.f32 %v665, %v157
    %v668 = vmul.f32 %v666, %v158
    %v669 = vadd.f32 %v667, %v159
    %v670 = vadd.f32 %v668, %v160
    %v671 = vmul.f32 %v669, %v584
    %v672 = vmul.f32 %v669, %v670
    %674 = vrot.lane.b32.xlu0 %v672, 64
    %v675 = vpop.permute.xlu0 %674
    %v677 = vadd.f32 %v671, %v675
    %v678 = vtanh.pop %v677
    %v679 = vmul.f32 %v670, %v678
    %v680 = vld [vmem:[#allocation2 + $0x10] sm:$0xc]
    %v681 = vld [vmem:[#allocation2 + $0x18] sm:$0xc]
    %v684 = vrot.slane %v680, 2
    %v685 = vrot.slane %v681, 2
    %v689 = vsel %vm66, %v679, 0
    %691 = vmatprep.subr.mxu0 0.0
    %692 = vmatpush1.msra.mxu0 0.0
    %693 = vmatprep.subr.mxu0 0.0
    %694 = vmatpush1.msra.mxu0 0.0
    %695 = vmatprep.subr.mxu0 0.0
    %696 = vmatpush1.msra.mxu0 0.0
    %697 = vmatprep.subr.mxu0 0.0
    %698 = vmatpush1.msra.mxu0 0.0
    %699 = vmatprep.subr.mxu0 0.0
    %700 = vmatpush1.msra.mxu0 0.0
    %701 = vmatprep.subr.mxu0 0.0
    %702 = vmatpush1.msra.mxu0 0.0
    %703 = vmatprep.subr.mxu0 0.0
    %704 = vmatpush1.msra.mxu0 0.0
    %705 = vmatprep.subr.mxu0 0.0
    %706 = vmatpush1.msra.mxu0 0.0
    %707 = vmatprep.subr.mxu0 %v194
    %708 = vmatpush1.msra.mxu0 %v193
    %709 = vmatprep.subr.mxu0 %v192
    %710 = vmatpush1.msra.mxu0 %v191
    %711 = vmatprep.subr.mxu0 %v190
    %712 = vmatpush1.msra.mxu0 %v189
    %713 = vmatprep.subr.mxu0 %v188
    %714 = vmatpush1.msra.mxu0 %v187
    %715 = vmatprep.subr.mxu0 %v186
    %716 = vmatpush1.msra.mxu0 %v185
    %717 = vmatprep.subr.mxu0 %v184
    %718 = vmatpush1.msra.mxu0 %v183
    %719 = vmatprep.subr.mxu0 %v182
    %720 = vmatpush1.msra.mxu0 %v181
    %721 = vmatprep.subr.mxu0 %v180
    %722 = vmatpush1.msra.mxu0 %v179
    %723 = vmatprep.subr.mxu0 0.0
    %724 = vmatpush2.msra.mxu0 0.0
    %725 = vmatprep.subr.mxu0 0.0
    %726 = vmatpush2.msra.mxu0 0.0
    %727 = vmatprep.subr.mxu0 0.0
    %728 = vmatpush2.msra.mxu0 0.0
    %729 = vmatprep.subr.mxu0 0.0
    %730 = vmatpush2.msra.mxu0 0.0
    %731 = vmatprep.subr.mxu0 0.0
    %732 = vmatpush2.msra.mxu0 0.0
    %733 = vmatprep.subr.mxu0 0.0
    %734 = vmatpush2.msra.mxu0 0.0
    %735 = vmatprep.subr.mxu0 0.0
    %736 = vmatpush2.msra.mxu0 0.0
    %737 = vmatprep.subr.mxu0 0.0
    %738 = vmatpush2.msra.mxu0 0.0
    %739 = vmatprep.subr.mxu0 0.0
    %740 = vmatpush2.msra.mxu0 0.0
    %741 = vmatprep.subr.mxu0 0.0
    %742 = vmatpush2.msra.mxu0 0.0
    %743 = vmatprep.subr.mxu0 0.0
    %744 = vmatpush2.msra.mxu0 0.0
    %745 = vmatprep.subr.mxu0 0.0
    %746 = vmatpush2.msra.mxu0 0.0
    %747 = vmatprep.subr.mxu0 0.0
    %748 = vmatpush2.msra.mxu0 0.0
    %749 = vmatprep.subr.mxu0 0.0
    %750 = vmatpush2.msra.mxu0 0.0
    %751 = vmatprep.subr.mxu0 0.0
    %752 = vmatpush2.msra.mxu0 0.0
    %753 = vmatprep.subr.mxu0 0.0
    %754 = vmatpush2.msra.mxu0 0.0
    %755 = vmatprep.mubr.f32.mxu0 0.0
    %756 = vmatmul.mubr.f32.gmra.mxu0 %v689
    %v757 = vpop.f32.mrf.mxu0
    %v758 = vadd.f32 %v684, %v757
    %v759 = vpop.f32.mrf.mxu0
    %v760 = vadd.f32 %v685, %v759
    %761 = vdwg.mxu0
    %v762 = vmul.f32 %v758, %v157
    %v763 = vmul.f32 %v760, %v158
    %v764 = vtanh.pop %v762
    %v765 = vtanh.pop %v763
    %v766 = vmul.f32 %v764, %v157
    %v767 = vmul.f32 %v765, %v158
    %v768 = vadd.f32 %v766, %v159
    %v769 = vadd.f32 %v767, %v160
    %v770 = vmul.f32 %v768, %v677
    %v771 = vmul.f32 %v768, %v769
    %773 = vrot.lane.b32.xlu0 %v771, 64
    %v774 = vpop.permute.xlu0 %773
    %v776 = vadd.f32 %v770, %v774
    %v777 = vtanh.pop %v776
    %v778 = vmul.f32 %v769, %v777
    %v779 = vld [vmem:[#allocation2 + $0x10] sm:$0x30]
    %v780 = vld [vmem:[#allocation2 + $0x18] sm:$0x30]
    %v783 = vrot.slane %v779, 4
    %v784 = vrot.slane %v780, 4
    %v788 = vsel %vm66, %v778, 0
    %790 = vmatprep.subr.mxu0 0.0
    %791 = vmatpush1.msra.mxu0 0.0
    %792 = vmatprep.subr.mxu0 0.0
    %793 = vmatpush1.msra.mxu0 0.0
    %794 = vmatprep.subr.mxu0 0.0
    %795 = vmatpush1.msra.mxu0 0.0
    %796 = vmatprep.subr.mxu0 0.0
    %797 = vmatpush1.msra.mxu0 0.0
    %798 = vmatprep.subr.mxu0 0.0
    %799 = vmatpush1.msra.mxu0 0.0
    %800 = vmatprep.subr.mxu0 0.0
    %801 = vmatpush1.msra.mxu0 0.0
    %802 = vmatprep.subr.mxu0 0.0
    %803 = vmatpush1.msra.mxu0 0.0
    %804 = vmatprep.subr.mxu0 0.0
    %805 = vmatpush1.msra.mxu0 0.0
    %806 = vmatprep.subr.mxu0 %v194
    %807 = vmatpush1.msra.mxu0 %v193
    %808 = vmatprep.subr.mxu0 %v192
    %809 = vmatpush1.msra.mxu0 %v191
    %810 = vmatprep.subr.mxu0 %v190
    %811 = vmatpush1.msra.mxu0 %v189
    %812 = vmatprep.subr.mxu0 %v188
    %813 = vmatpush1.msra.mxu0 %v187
    %814 = vmatprep.subr.mxu0 %v186
    %815 = vmatpush1.msra.mxu0 %v185
    %816 = vmatprep.subr.mxu0 %v184
    %817 = vmatpush1.msra.mxu0 %v183
    %818 = vmatprep.subr.mxu0 %v182
    %819 = vmatpush1.msra.mxu0 %v181
    %820 = vmatprep.subr.mxu0 %v180
    %821 = vmatpush1.msra.mxu0 %v179
    %822 = vmatprep.subr.mxu0 0.0
    %823 = vmatpush2.msra.mxu0 0.0
    %824 = vmatprep.subr.mxu0 0.0
    %825 = vmatpush2.msra.mxu0 0.0
    %826 = vmatprep.subr.mxu0 0.0
    %827 = vmatpush2.msra.mxu0 0.0
    %828 = vmatprep.subr.mxu0 0.0
    %829 = vmatpush2.msra.mxu0 0.0
    %830 = vmatprep.subr.mxu0 0.0
    %831 = vmatpush2.msra.mxu0 0.0
    %832 = vmatprep.subr.mxu0 0.0
    %833 = vmatpush2.msra.mxu0 0.0
    %834 = vmatprep.subr.mxu0 0.0
    %835 = vmatpush2.msra.mxu0 0.0
    %836 = vmatprep.subr.mxu0 0.0
    %837 = vmatpush2.msra.mxu0 0.0
    %838 = vmatprep.subr.mxu0 0.0
    %839 = vmatpush2.msra.mxu0 0.0
    %840 = vmatprep.subr.mxu0 0.0
    %841 = vmatpush2.msra.mxu0 0.0
    %842 = vmatprep.subr.mxu0 0.0
    %843 = vmatpush2.msra.mxu0 0.0
    %844 = vmatprep.subr.mxu0 0.0
    %845 = vmatpush2.msra.mxu0 0.0
    %846 = vmatprep.subr.mxu0 0.0
    %847 = vmatpush2.msra.mxu0 0.0
    %848 = vmatprep.subr.mxu0 0.0
    %849 = vmatpush2.msra.mxu0 0.0
    %850 = vmatprep.subr.mxu0 0.0
    %851 = vmatpush2.msra.mxu0 0.0
    %852 = vmatprep.subr.mxu0 0.0
    %853 = vmatpush2.msra.mxu0 0.0
    %854 = vmatprep.mubr.f32.mxu0 0.0
    %855 = vmatmul.mubr.f32.gmra.mxu0 %v788
    %v856 = vpop.f32.mrf.mxu0
    %v857 = vadd.f32 %v783, %v856
    %v858 = vpop.f32.mrf.mxu0
    %v859 = vadd.f32 %v784, %v858
    %860 = vdwg.mxu0
    %v861 = vmul.f32 %v857, %v157
    %v862 = vmul.f32 %v859, %v158
    %v863 = vtanh.pop %v861
    %v864 = vtanh.pop %v862
    %v865 = vmul.f32 %v863, %v157
    %v866 = vmul.f32 %v864, %v158
    %v867 = vadd.f32 %v865, %v159
    %v868 = vadd.f32 %v866, %v160
    %v869 = vmul.f32 %v867, %v776
    %v870 = vmul.f32 %v867, %v868
    %872 = vrot.lane.b32.xlu0 %v870, 64
    %v873 = vpop.permute.xlu0 %872
    %v875 = vadd.f32 %v869, %v873
    %v876 = vtanh.pop %v875
    %v877 = vmul.f32 %v868, %v876
    %v878 = vld [vmem:[#allocation2 + $0x10] sm:$0xc0]
    %v879 = vld [vmem:[#allocation2 + $0x18] sm:$0xc0]
    %v882 = vrot.slane %v878, 6
    %v883 = vrot.slane %v879, 6
    %v887 = vsel %vm66, %v877, 0
    %889 = vmatprep.subr.mxu0 0.0
    %890 = vmatpush1.msra.mxu0 0.0
    %891 = vmatprep.subr.mxu0 0.0
    %892 = vmatpush1.msra.mxu0 0.0
    %893 = vmatprep.subr.mxu0 0.0
    %894 = vmatpush1.msra.mxu0 0.0
    %895 = vmatprep.subr.mxu0 0.0
    %896 = vmatpush1.msra.mxu0 0.0
    %897 = vmatprep.subr.mxu0 0.0
    %898 = vmatpush1.msra.mxu0 0.0
    %899 = vmatprep.subr.mxu0 0.0
    %900 = vmatpush1.msra.mxu0 0.0
    %901 = vmatprep.subr.mxu0 0.0
    %902 = vmatpush1.msra.mxu0 0.0
    %903 = vmatprep.subr.mxu0 0.0
    %904 = vmatpush1.msra.mxu0 0.0
    %905 = vmatprep.subr.mxu0 %v194
    %906 = vmatpush1.msra.mxu0 %v193
    %907 = vmatprep.subr.mxu0 %v192
    %908 = vmatpush1.msra.mxu0 %v191
    %909 = vmatprep.subr.mxu0 %v190
    %910 = vmatpush1.msra.mxu0 %v189
    %911 = vmatprep.subr.mxu0 %v188
    %912 = vmatpush1.msra.mxu0 %v187
    %913 = vmatprep.subr.mxu0 %v186
    %914 = vmatpush1.msra.mxu0 %v185
    %915 = vmatprep.subr.mxu0 %v184
    %916 = vmatpush1.msra.mxu0 %v183
    %917 = vmatprep.subr.mxu0 %v182
    %918 = vmatpush1.msra.mxu0 %v181
    %919 = vmatprep.subr.mxu0 %v180
    %920 = vmatpush1.msra.mxu0 %v179
    %921 = vmatprep.subr.mxu0 0.0
    %922 = vmatpush2.msra.mxu0 0.0
    %923 = vmatprep.subr.mxu0 0.0
    %924 = vmatpush2.msra.mxu0 0.0
    %925 = vmatprep.subr.mxu0 0.0
    %926 = vmatpush2.msra.mxu0 0.0
    %927 = vmatprep.subr.mxu0 0.0
    %928 = vmatpush2.msra.mxu0 0.0
    %929 = vmatprep.subr.mxu0 0.0
    %930 = vmatpush2.msra.mxu0 0.0
    %931 = vmatprep.subr.mxu0 0.0
    %932 = vmatpush2.msra.mxu0 0.0
    %933 = vmatprep.subr.mxu0 0.0
    %934 = vmatpush2.msra.mxu0 0.0
    %935 = vmatprep.subr.mxu0 0.0
    %936 = vmatpush2.msra.mxu0 0.0
    %937 = vmatprep.subr.mxu0 0.0
    %938 = vmatpush2.msra.mxu0 0.0
    %939 = vmatprep.subr.mxu0 0.0
    %940 = vmatpush2.msra.mxu0 0.0
    %941 = vmatprep.subr.mxu0 0.0
    %942 = vmatpush2.msra.mxu0 0.0
    %943 = vmatprep.subr.mxu0 0.0
    %944 = vmatpush2.msra.mxu0 0.0
    %945 = vmatprep.subr.mxu0 0.0
    %946 = vmatpush2.msra.mxu0 0.0
    %947 = vmatprep.subr.mxu0 0.0
    %948 = vmatpush2.msra.mxu0 0.0
    %949 = vmatprep.subr.mxu0 0.0
    %950 = vmatpush2.msra.mxu0 0.0
    %951 = vmatprep.subr.mxu0 0.0
    %952 = vmatpush2.msra.mxu0 0.0
    %953 = vmatprep.mubr.f32.mxu0 0.0
    %954 = vmatmul.mubr.f32.gmra.mxu0 %v887
    %v955 = vpop.f32.mrf.mxu0
    %v956 = vadd.f32 %v882, %v955
    %v957 = vpop.f32.mrf.mxu0
    %v958 = vadd.f32 %v883, %v957
    %959 = vdwg.mxu0
    %v960 = vmul.f32 %v956, %v157
    %v961 = vmul.f32 %v958, %v158
    %v962 = vtanh.pop %v960
    %v963 = vtanh.pop %v961
    %v964 = vmul.f32 %v962, %v157
    %v965 = vmul.f32 %v963, %v158
    %v966 = vadd.f32 %v964, %v159
    %v967 = vadd.f32 %v965, %v160
    %v968 = vmul.f32 %v966, %v875
    %v969 = vmul.f32 %v966, %v967
    %971 = vrot.lane.b32.xlu0 %v969, 64
    %v972 = vpop.permute.xlu0 %971
    %v974 = vadd.f32 %v968, %v972
    %v975 = vtanh.pop %v974
    %v976 = vmul.f32 %v967, %v975
    %v978 = vsel %vm66, %v976, 0
    %980 = vmatprep.subr.mxu0 0.0
    %981 = vmatpush1.msra.mxu0 0.0
    %982 = vmatprep.subr.mxu0 0.0
    %983 = vmatpush1.msra.mxu0 0.0
    %984 = vmatprep.subr.mxu0 0.0
    %985 = vmatpush1.msra.mxu0 0.0
    %986 = vmatprep.subr.mxu0 0.0
    %987 = vmatpush1.msra.mxu0 0.0
    %988 = vmatprep.subr.mxu0 0.0
    %989 = vmatpush1.msra.mxu0 0.0
    %990 = vmatprep.subr.mxu0 0.0
    %991 = vmatpush1.msra.mxu0 0.0
    %992 = vmatprep.subr.mxu0 0.0
    %993 = vmatpush1.msra.mxu0 0.0
    %994 = vmatprep.subr.mxu0 0.0
    %995 = vmatpush1.msra.mxu0 0.0
    %996 = vmatprep.subr.mxu0 %v194
    %997 = vmatpush1.msra.mxu0 %v193
    %998 = vmatprep.subr.mxu0 %v192
    %999 = vmatpush1.msra.mxu0 %v191
    %1000 = vmatprep.subr.mxu0 %v190
    %1001 = vmatpush1.msra.mxu0 %v189
    %1002 = vmatprep.subr.mxu0 %v188
    %1003 = vmatpush1.msra.mxu0 %v187
    %1004 = vmatprep.subr.mxu0 %v186
    %1005 = vmatpush1.msra.mxu0 %v185
    %1006 = vmatprep.subr.mxu0 %v184
    %1007 = vmatpush1.msra.mxu0 %v183
    %1008 = vmatprep.subr.mxu0 %v182
    %1009 = vmatpush1.msra.mxu0 %v181
    %1010 = vmatprep.subr.mxu0 %v180
    %1011 = vmatpush1.msra.mxu0 %v179
    %1012 = vmatprep.subr.mxu0 0.0
    %1013 = vmatpush2.msra.mxu0 0.0
    %1014 = vmatprep.subr.mxu0 0.0
    %1015 = vmatpush2.msra.mxu0 0.0
    %1016 = vmatprep.subr.mxu0 0.0
    %1017 = vmatpush2.msra.mxu0 0.0
    %1018 = vmatprep.subr.mxu0 0.0
    %1019 = vmatpush2.msra.mxu0 0.0
    %1020 = vmatprep.subr.mxu0 0.0
    %1021 = vmatpush2.msra.mxu0 0.0
    %1022 = vmatprep.subr.mxu0 0.0
    %1023 = vmatpush2.msra.mxu0 0.0
    %1024 = vmatprep.subr.mxu0 0.0
    %1025 = vmatpush2.msra.mxu0 0.0
    %1026 = vmatprep.subr.mxu0 0.0
    %1027 = vmatpush2.msra.mxu0 0.0
    %1028 = vmatprep.subr.mxu0 0.0
    %1029 = vmatpush2.msra.mxu0 0.0
    %1030 = vmatprep.subr.mxu0 0.0
    %1031 = vmatpush2.msra.mxu0 0.0
    %1032 = vmatprep.subr.mxu0 0.0
    %1033 = vmatpush2.msra.mxu0 0.0
    %1034 = vmatprep.subr.mxu0 0.0
    %1035 = vmatpush2.msra.mxu0 0.0
    %1036 = vmatprep.subr.mxu0 0.0
    %1037 = vmatpush2.msra.mxu0 0.0
    %1038 = vmatprep.subr.mxu0 0.0
    %1039 = vmatpush2.msra.mxu0 0.0
    %1040 = vmatprep.subr.mxu0 0.0
    %1041 = vmatpush2.msra.mxu0 0.0
    %1042 = vmatprep.subr.mxu0 0.0
    %1043 = vmatpush2.msra.mxu0 0.0
    %1044 = vmatprep.mubr.f32.mxu0 0.0
    %1045 = vmatmul.mubr.f32.gmra.mxu0 %v978
    %v1046 = vpop.f32.mrf.mxu0
    %v1047 = vadd.f32 %v882, %v1046
    %v1048 = vpop.f32.mrf.mxu0
    %v1049 = vadd.f32 %v883, %v1048
    %1050 = vdwg.mxu0
    %v1051 = vmul.f32 %v1047, %v157
    %v1052 = vmul.f32 %v1049, %v158
    %v1053 = vtanh.pop %v1051
    %v1054 = vtanh.pop %v1052
    %v1055 = vmul.f32 %v1053, %v157
    %v1056 = vmul.f32 %v1054, %v158
    %v1057 = vadd.f32 %v1055, %v159
    %v1058 = vadd.f32 %v1056, %v160
    %v1059 = vmul.f32 %v1057, %v974
    %v1060 = vmul.f32 %v1057, %v1058
    %1062 = vrot.lane.b32.xlu0 %v1060, 64
    %v1063 = vpop.permute.xlu0 %1062
    %v1065 = vadd.f32 %v1059, %v1063
    %v1066 = vtanh.pop %v1065
    %v1067 = vmul.f32 %v1058, %v1066
    %v1068 = vsel %vm161, %v974, %v1065
    %v1069 = vsel %vm161, %v976, %v1067
    %vm1070 = vcmask 254976
    %1071 = vst.msk [vmem:[#allocation6] sm:$0x3] %vm1070, %v1069
    %1073 = vrot.lane.b32.xlu0 %v1069, 96
    %v1074 = vpop.permute.xlu0 %1073
    %s1076 = scalar_lea.vmem [#allocation6], 2
    %1077 = vst.msk [vmem:[%s1076] sm:$0x3] %vm1070, %v1074
    %1078 = vst.msk [vmem:[#allocation7] sm:$0x3] %vm1070, %v1068
    %1080 = vrot.lane.b32.xlu0 %v1068, 96
    %v1081 = vpop.permute.xlu0 %1080
    %s1083 = scalar_lea.vmem [#allocation7], 2
    %1084 = vst.msk [vmem:[%s1083] sm:$0x3] %vm1070, %v1081
    %v1085 = vrot.slane %v487, 6
    %v1087 = vrot.slane %v586, 4
    %v1089 = vrot.slane %v679, 2
    %v1091 = vrot.slane %v877, 6
    %v1093 = vrot.slane %v976, 4
    %v1095 = vrot.slane %v1069, 2
    %vm1097 = vcmask 1041408
    %v1098 = vsel %vm1097, %v388, %v1085
    %vm1099 = vcmask 1043456
    %v1100 = vsel %vm1099, %v1098, %v1087
    %vm1101 = vcmask 1045504
    %v1102 = vsel %vm1101, %v1100, %v1089
    %v1103 = vsel %vm1097, %v778, %v1091
    %v1104 = vsel %vm1099, %v1103, %v1093
    %v1105 = vsel %vm1101, %v1104, %v1095
    %v1106 = vld [vmem:[#allocation3 + $0x100] sm:$0xff]
    %v1107 = vld [vmem:[#allocation3 + $0x110] sm:$0xff]
    %v1108 = vld [vmem:[#allocation3 + $0x120] sm:$0xff]
    %v1109 = vld [vmem:[#allocation3 + $0x130] sm:$0xff]
    %v1110 = vld [vmem:[#allocation3 + $0x140] sm:$0xff]
    %v1111 = vld [vmem:[#allocation3 + $0x150] sm:$0xff]
    %v1112 = vld [vmem:[#allocation3 + $0x160] sm:$0xff]
    %v1113 = vld [vmem:[#allocation3 + $0x170] sm:$0xff]
    %v1115 = vsel %vm66, %v1102, 0
    %v1118 = vsel %vm66, %v1105, 0
    %1120 = vmatprep.subr.mxu0 0.0
    %1121 = vmatpush1.msra.mxu0 0.0
    %1122 = vmatprep.subr.mxu0 0.0
    %1123 = vmatpush1.msra.mxu0 0.0
    %1124 = vmatprep.subr.mxu0 0.0
    %1125 = vmatpush1.msra.mxu0 0.0
    %1126 = vmatprep.subr.mxu0 0.0
    %1127 = vmatpush1.msra.mxu0 0.0
    %1128 = vmatprep.subr.mxu0 0.0
    %1129 = vmatpush1.msra.mxu0 0.0
    %1130 = vmatprep.subr.mxu0 0.0
    %1131 = vmatpush1.msra.mxu0 0.0
    %1132 = vmatprep.subr.mxu0 0.0
    %1133 = vmatpush1.msra.mxu0 0.0
    %1134 = vmatprep.subr.mxu0 0.0
    %1135 = vmatpush1.msra.mxu0 0.0
    %1136 = vmatprep.subr.mxu0 0.0
    %1137 = vmatpush1.msra.mxu0 %v1113
    %1138 = vmatprep.subr.mxu0 0.0
    %1139 = vmatpush1.msra.mxu0 %v1112
    %1140 = vmatprep.subr.mxu0 0.0
    %1141 = vmatpush1.msra.mxu0 %v1111
    %1142 = vmatprep.subr.mxu0 0.0
    %1143 = vmatpush1.msra.mxu0 %v1110
    %1144 = vmatprep.subr.mxu0 0.0
    %1145 = vmatpush1.msra.mxu0 %v1109
    %1146 = vmatprep.subr.mxu0 0.0
    %1147 = vmatpush1.msra.mxu0 %v1108
    %1148 = vmatprep.subr.mxu0 0.0
    %1149 = vmatpush1.msra.mxu0 %v1107
    %1150 = vmatprep.subr.mxu0 0.0
    %1151 = vmatpush1.msra.mxu0 %v1106
    %1152 = vmatprep.subr.mxu0 0.0
    %1153 = vmatpush2.msra.mxu0 0.0
    %1154 = vmatprep.subr.mxu0 0.0
    %1155 = vmatpush2.msra.mxu0 0.0
    %1156 = vmatprep.subr.mxu0 0.0
    %1157 = vmatpush2.msra.mxu0 0.0
    %1158 = vmatprep.subr.mxu0 0.0
    %1159 = vmatpush2.msra.mxu0 0.0
    %1160 = vmatprep.subr.mxu0 0.0
    %1161 = vmatpush2.msra.mxu0 0.0
    %1162 = vmatprep.subr.mxu0 0.0
    %1163 = vmatpush2.msra.mxu0 0.0
    %1164 = vmatprep.subr.mxu0 0.0
    %1165 = vmatpush2.msra.mxu0 0.0
    %1166 = vmatprep.subr.mxu0 0.0
    %1167 = vmatpush2.msra.mxu0 0.0
    %1168 = vmatprep.subr.mxu0 0.0
    %1169 = vmatpush2.msra.mxu0 0.0
    %1170 = vmatprep.subr.mxu0 0.0
    %1171 = vmatpush2.msra.mxu0 0.0
    %1172 = vmatprep.subr.mxu0 0.0
    %1173 = vmatpush2.msra.mxu0 0.0
    %1174 = vmatprep.subr.mxu0 0.0
    %1175 = vmatpush2.msra.mxu0 0.0
    %1176 = vmatprep.subr.mxu0 0.0
    %1177 = vmatpush2.msra.mxu0 0.0
    %1178 = vmatprep.subr.mxu0 0.0
    %1179 = vmatpush2.msra.mxu0 0.0
    %1180 = vmatprep.subr.mxu0 0.0
    %1181 = vmatpush2.msra.mxu0 0.0
    %1182 = vmatprep.subr.mxu0 0.0
    %1183 = vmatpush2.msra.mxu0 0.0
    %1184 = vmatprep.mubr.f32.mxu0 0.0
    %1185 = vmatmul.mubr.f32.gmra.mxu0 %v1115
    %v1186 = vpop.f32.mrf.mxu0
    %v1187 = vadd.f32 0.0, %v1186
    %v1188 = vpop.f32.mrf.mxu0
    %1189 = vmatprep.mubr.f32.mxu0 0.0
    %1190 = vmatmul.mubr.f32.gmra.mxu0 %v1118
    %v1191 = vpop.f32.mrf.mxu0
    %v1192 = vadd.f32 0.0, %v1191
    %v1193 = vpop.f32.mrf.mxu0
    %1194 = vdwg.mxu0
    %vm1195 = vcmp.ge.s32.totalorder %v55, 2
    %vm1196 = vcmp.lt.s32.totalorder %v55, 8
    %vm1197 = vmand %vm1195, %vm1196
    %vm1198 = vcmp.ge.s32.totalorder %v55, 8
    %vm1199 = vcmp.lt.s32.totalorder %v55, 40
    %vm1200 = vmand %vm1198, %vm1199
    %vm1201 = vcmp.lt.s32.totalorder %v55, 2
    %vm1202 = vcmp.ge.s32.totalorder %v55, 40
    %vm1203 = vcmp.lt.s32.totalorder %v55, 42
    %vm1204 = vmand %vm1202, %vm1203
    %vm1205 = vmor %vm1201, %vm1204
    %v1206 = vsel %vm1205, %v1187, -1e+30
    %v1207 = vsel %vm1205, %v1192, -1e+30
    %1208 = vmax.xlane.f32.xlu0 %v1206
    %v1209 = vpop.xlane.xlu0 %1208
    %1210 = vmax.xlane.f32.xlu0 %v1207
    %v1211 = vpop.xlane.xlu0 %1210
    %v1212 = vsel %vm1197, %v1187, -1e+30
    %v1213 = vsel %vm1197, %v1192, -1e+30
    %1214 = vmax.xlane.f32.xlu0 %v1212
    %v1215 = vpop.xlane.xlu0 %1214
    %1216 = vmax.xlane.f32.xlu0 %v1213
    %v1217 = vpop.xlane.xlu0 %1216
    %v1218 = vsel %vm1200, %v1187, -1e+30
    %v1219 = vsel %vm1200, %v1192, -1e+30
    %1220 = vmax.xlane.f32.xlu0 %v1218
    %v1221 = vpop.xlane.xlu0 %1220
    %1222 = vmax.xlane.f32.xlu0 %v1219
    %v1223 = vpop.xlane.xlu0 %1222
    %v1224 = vsel %vm1200, %v1221, %v1209
    %v1225 = vsel %vm1200, %v1223, %v1211
    %v1226 = vsel %vm1197, %v1215, %v1224
    %v1227 = vsel %vm1197, %v1217, %v1225
    %v1228 = vsub.f32 %v1187, %v1226
    %v1229 = vsub.f32 %v1192, %v1227
    %v1230 = vmul.f32 %v1228, 1.442695
    %v1231 = vpow.pop %v1230
    %v1232 = vmul.f32 %v1229, 1.442695
    %v1233 = vpow.pop %v1232
    %v1234 = vsel %vm1205, %v1231, 0.0
    %v1235 = vsel %vm1205, %v1233, 0.0
    %1236 = vadd.xlane.f32.xlu0 %v1234
    %v1237 = vpop.xlane.xlu0 %1236
    %1238 = vadd.xlane.f32.xlu0 %v1235
    %v1239 = vpop.xlane.xlu0 %1238
    %v1240 = vsel %vm1197, %v1231, 0.0
    %v1241 = vsel %vm1197, %v1233, 0.0
    %1242 = vadd.xlane.f32.xlu0 %v1240
    %v1243 = vpop.xlane.xlu0 %1242
    %1244 = vadd.xlane.f32.xlu0 %v1241
    %v1245 = vpop.xlane.xlu0 %1244
    %v1246 = vsel %vm1200, %v1231, 0.0
    %v1247 = vsel %vm1200, %v1233, 0.0
    %1248 = vadd.xlane.f32.xlu0 %v1246
    %v1249 = vpop.xlane.xlu0 %1248
    %1250 = vadd.xlane.f32.xlu0 %v1247
    %v1251 = vpop.xlane.xlu0 %1250
    %v1252 = vsel %vm1200, %v1249, %v1237
    %v1253 = vsel %vm1200, %v1251, %v1239
    %v1254 = vsel %vm1197, %v1243, %v1252
    %v1255 = vsel %vm1197, %v1245, %v1253
    %v1256 = vlog2.pop %v1254
    %v1257 = vmul.f32 %v1256, 0.6931472
    %v1258 = vlog2.pop %v1255
    %v1259 = vmul.f32 %v1258, 0.6931472
    %v1260 = vsub.f32 %v1228, %v1257
    %v1261 = vsub.f32 %v1229, %v1259
    %1263 = vset.pattern.permute.xlu0 41
    %1264 = vperm.xlu0 %1263, %v1260
    %v1265 = vpop.permute.xlu0 %1264
    %1268 = vset.pattern.permute.xlu0 41
    %1269 = vperm.xlu0 %1268, %v1261
    %v1270 = vpop.permute.xlu0 %1269
    %v1272 = vsel %vm1200, %v1265, 0.0
    %v1273 = vsel %vm1200, %v1270, 0.0
    %1274 = vset.pattern.permute.xlu0 40
    %1275 = vperm.xlu0 %1274, %v1260
    %v1276 = vpop.permute.xlu0 %1275
    %1278 = vset.pattern.permute.xlu0 40
    %1279 = vperm.xlu0 %1278, %v1261
    %v1280 = vpop.permute.xlu0 %1279
    %v1282 = vsel %vm1197, %v1276, %v1272
    %v1283 = vsel %vm1197, %v1280, %v1273
    %v1284 = vadd.f32 %v1260, %v1282
    %v1285 = vadd.f32 %v1261, %v1283
    %vm1286 = vcmask 326656
    %1287 = vst.msk [vmem:[%s4] sm:$0xff] %vm1286, %v1284
    %1288 = vst.msk [vmem:[%s4 + $0x8] sm:$0xff] %vm1286, %v1285
    // Predicated region
    $region22: #{lstm_model_forward.1} parent=1 // pred_check
      _
    $region23: #{lstm_model_forward.1} parent=1 // pred_check_branch
      %1290 = sbr.rel (0) target = $region25
    $region24: #{lstm_model_forward.1} parent=1 // pred_region
      _
    $region25: #{lstm_model_forward.1} parent=1 // pred_fallthru
      _
    // Predicated region
    $region26: #{lstm_model_forward.1} parent=1 // pred_check
      _
    $region27: #{lstm_model_forward.1} parent=1 // pred_check_branch
      %1292 = sbr.rel (0) target = $region29
    $region28: #{lstm_model_forward.1} parent=1 // pred_region
      %s1294 = ssub.s32 64, 64
      %1295 = vsyncadd [#allocation5], %s1294
      %s1296 = sshll.u32 [#allocation6], 4
      %s1297 = int_to_ptr.vmem [resolvable:$true] %s1296
      %1302 = dma.vmem_to_hbm [thread:$0]  %s1297, 64, %s5, [#allocation5], 32, 32, 2
    $region29: #{lstm_model_forward.1} parent=1 // pred_fallthru
      _
    // Predicated region
    $region30: #{lstm_model_forward.1} parent=1 // pred_check
      _
    $region31: #{lstm_model_forward.1} parent=1 // pred_check_branch
      %1304 = sbr.rel (0) target = $region33
    $region32: #{lstm_model_forward.1} parent=1 // pred_region
      %s1306 = ssub.s32 64, 64
      %1307 = vsyncadd [#allocation8], %s1306
      %s1308 = sshll.u32 [#allocation7], 4
      %s1309 = int_to_ptr.vmem [resolvable:$true] %s1308
      %1314 = dma.vmem_to_hbm [thread:$0]  %s1309, 64, %s6, [#allocation8], 32, 32, 2
    $region33: #{lstm_model_forward.1} parent=1 // pred_fallthru
      _
    // Predicated region
    $region34: #{lstm_model_forward.1} parent=1 // pred_check
      _
    $region35: #{lstm_model_forward.1} parent=1 // pred_check_branch
      %1316 = sbr.rel (0) target = $region37
    $region36: #{lstm_model_forward.1} parent=1 // pred_region
      _
    $region37: #{lstm_model_forward.1} parent=1 // pred_fallthru
      _
    // Predicated region
    $region38: #{lstm_model_forward.1} parent=1 // pred_check
      _
    $region39: #{lstm_model_forward.1} parent=1 // pred_check_branch
      %1318 = sbr.rel (0) target = $region41
    $region40: #{lstm_model_forward.1} parent=1 // pred_region
      %1319 = dma.done [#allocation5], 64
    $region41: #{lstm_model_forward.1} parent=1 // pred_fallthru
      _
    // Predicated region
    $region42: #{lstm_model_forward.1} parent=1 // pred_check
      _
    $region43: #{lstm_model_forward.1} parent=1 // pred_check_branch
      %1321 = sbr.rel (0) target = $region45
    $region44: #{lstm_model_forward.1} parent=1 // pred_region
      %1322 = dma.done [#allocation8], 64
    $region45: #{lstm_model_forward.1} parent=1 // pred_fallthru
      _
    %1323 = vsyncpa [#allocation4], 1
    %1324 = vsyncpa [#allocation5], 1
    %1325 = vsyncpa [#allocation8], 1

</llo_original>
